<compile_context>
chip_gen: v7x
topology: tpu7x:2x2x1
jax: 0.10.0
libtpu: 0.0.40
codegen_flags: <defaults>
</compile_context>

<pallas_src>
import jax
import jax.numpy as jnp
from jax.experimental import pallas as pl
from jax.experimental.pallas import tpu as pltpu

P = jax.lax.Precision.HIGHEST  # used only by the pure-JAX reference


def _round_up(x: int, m: int) -> int:
    return (x + m - 1) // m * m


def _bilinear_matrix(n_out: int, n_in: int) -> jnp.ndarray:
    """Interpolation matrix M (n_out, n_in) s.t. y = M @ x matches
    F.interpolate(mode='bilinear', align_corners=True) along one axis."""
    o = jnp.arange(n_out, dtype=jnp.float32)
    if n_out == 1:
        src = jnp.zeros((1,), jnp.float32)
    else:
        src = o * (n_in - 1) / (n_out - 1)
    lo = jnp.clip(jnp.floor(src).astype(jnp.int32), 0, n_in - 1)
    hi = jnp.clip(lo + 1, 0, n_in - 1)
    frac = src - lo.astype(jnp.float32)
    m = jnp.zeros((n_out, n_in), jnp.float32)
    m = m.at[jnp.arange(n_out), lo].add(1.0 - frac)
    m = m.at[jnp.arange(n_out), hi].add(frac)
    return m


def _seg_head_kernel(pT_ref, w3_ref, sh_ref, w1_ref, b1_ref, up_ref,
                     o_ref, fm_ref):
    # pT_ref : (1, Kpad, H*W)      transposed im2col patches (K zero-padded)
    # w3_ref : (Cpad, Kpad)        3x3 conv weights^T with BN scale folded in
    # sh_ref : (Cpad, 1)           folded BatchNorm shift (per channel)
    # w1_ref : (NC, Cpad)          1x1 conv weights^T (class/channel padded)
    # b1_ref : (NC, 1)             1x1 conv bias
    # up_ref : (H*W, Hout*Wout)    bilinear upsample matrix (kron(ah, aw))^T
    # o_ref  : (1, NC, Hout*Wout)  lane-dense output slab
    # fm_ref : (Cpad, H*W)         VMEM scratch for the conv feature map

    # --- 3x3 conv (padding=1, stride=1, no bias) as one im2col matmul ---
    acc = jnp.dot(w3_ref[...], pT_ref[0], preferred_element_type=jnp.float32)

    # --- BatchNorm (eval-mode, scale already folded into weights) + ReLU ---
    fm_ref[...] = jnp.maximum(acc + sh_ref[...], 0.0)

    # --- 1x1 conv (+ bias), all classes at once ---
    seg = jnp.dot(w1_ref[...], fm_ref[...],
                  preferred_element_type=jnp.float32) + b1_ref[...]  # (NC, H*W)

    # --- bilinear upsample (align_corners=True), all classes, one matmul ---
    o_ref[0] = jnp.dot(seg, up_ref[...],
                       preferred_element_type=jnp.float32).astype(o_ref.dtype)


def seg_output_head(x_nchw, w3_hwio, gamma, beta, running_mean, running_var,
                    w1, b1, scale, eps=1e-5):
    N, Cin, H, W = x_nchw.shape
    Cmid = w3_hwio.shape[-1]
    nc = w1.shape[-1]
    Hout, Wout = H * scale, W * scale
    HW, HoWo = H * W, Hout * Wout

    K = 9 * Cin
    Kpad = _round_up(K, 128)      # sublane-aligned im2col contraction dim
    Cpad = _round_up(Cmid, 128)   # aligned feature-map channels
    NC = _round_up(nc, 8)         # sublane-friendly class padding

    # ---- im2col + transpose + padding (layout plumbing stays in XLA) ----
    x = jnp.transpose(x_nchw, (0, 2, 3, 1)).astype(jnp.float32)      # NHWC
    xp = jnp.pad(x, ((0, 0), (1, 1), (1, 1), (0, 0)))
    taps = [xp[:, dy:dy + H, dx:dx + W, :] for dy in range(3) for dx in range(3)]
    patches = jnp.concatenate(taps, axis=-1).reshape(N, HW, K)
    patchesT = jnp.transpose(patches, (0, 2, 1))                      # (N, K, H*W)
    patchesT = jnp.pad(patchesT, ((0, 0), (0, Kpad - K), (0, 0)))

    # Fold eval-mode BN scale into the 3x3 conv weights; keep the shift separate.
    inv_std = 1.0 / jnp.sqrt(running_var + eps)
    bn_scale = (gamma * inv_std).astype(jnp.float32)                  # (Cmid,)
    bn_shift = (beta - running_mean * gamma * inv_std).astype(jnp.float32)

    w3s = w3_hwio.reshape(K, Cmid).astype(jnp.float32) * bn_scale[None, :]
    w3sT = jnp.pad(w3s.T, ((0, Cpad - Cmid), (0, Kpad - K)))          # (Cpad, Kpad)
    shift = jnp.pad(bn_shift, (0, Cpad - Cmid)).reshape(Cpad, 1)

    w1T = jnp.pad(w1.astype(jnp.float32).T, ((0, NC - nc), (0, Cpad - Cmid)))
    b1T = jnp.pad(b1.astype(jnp.float32), (0, NC - nc)).reshape(NC, 1)

    # Bilinear (align_corners=True) upsample as one matrix: UP^T (H*W, Hout*Wout).
    ah = _bilinear_matrix(Hout, H)            # (Hout, H)
    aw = _bilinear_matrix(Wout, W)            # (Wout, W)
    upT = jnp.einsum('oh,pw->hwop', ah, aw).reshape(HW, HoWo)

    out_slab = pl.pallas_call(
        _seg_head_kernel,
        out_shape=jax.ShapeDtypeStruct((N, NC, HoWo), jnp.float32),
        grid_spec=pltpu.PrefetchScalarGridSpec(
            num_scalar_prefetch=0,
            grid=(N,),
            in_specs=[
                pl.BlockSpec((1, Kpad, HW), lambda n: (n, 0, 0)),
                pl.BlockSpec((Cpad, Kpad), lambda n: (0, 0)),
                pl.BlockSpec((Cpad, 1), lambda n: (0, 0)),
                pl.BlockSpec((NC, Cpad), lambda n: (0, 0)),
                pl.BlockSpec((NC, 1), lambda n: (0, 0)),
                pl.BlockSpec((HW, HoWo), lambda n: (0, 0)),
            ],
            out_specs=pl.BlockSpec((1, NC, HoWo), lambda n: (n, 0, 0)),
            scratch_shapes=[pltpu.VMEM((Cpad, HW), jnp.float32)],
        ),
        compiler_params=pltpu.CompilerParams(
            dimension_semantics=("parallel",),
            vmem_limit_bytes=32 * 1024 * 1024,
        ),
    )(patchesT, w3sT, shift, w1T, b1T, upT)

    # slab (N, NC, Hout*Wout) -> NCHW, drop padded classes
    out = out_slab.reshape(N, NC, Hout, Wout)[:, :nc]
    return out


def reference_forward(x_nchw, w3_hwio, gamma, beta, running_mean, running_var,
                      w1, b1, scale, eps=1e-5):
    """Pure-JAX reference (same math, eval-mode BN, align_corners=True bilinear)."""
    N, Cin, H, W = x_nchw.shape
    x = jnp.transpose(x_nchw, (0, 2, 3, 1)).astype(jnp.float32)
    y = jax.lax.conv_general_dilated(
        x, w3_hwio, (1, 1), 'SAME',
        dimension_numbers=('NHWC', 'HWIO', 'NHWC'), precision=P)
    y = (y - running_mean) / jnp.sqrt(running_var + eps) * gamma + beta
    y = jnp.maximum(y, 0.0)
    seg = jnp.einsum('nhwc,co->nhwo', y, w1, precision=P) + b1
    Hout, Wout = H * scale, W * scale
    ah = _bilinear_matrix(Hout, H)
    aw = _bilinear_matrix(Wout, W)
    up = jnp.einsum('oh,nhwc->nowc', ah, seg, precision=P)
    up = jnp.einsum('pw,nowc->nopc', aw, up, precision=P)
    return jnp.transpose(up, (0, 3, 1, 2))


if __name__ == "__main__":
    key = jax.random.PRNGKey(0)
    ks = jax.random.split(key, 8)

    # Small shapes consistent with the module: is_aux=False -> Cmid=64
    N, Cin, H, W = 2, 4, 16, 16
    n_classes, scale = 3, 2
    Cmid = 64

    x = jax.random.normal(ks[0], (N, Cin, H, W), jnp.float32)
    w3 = jax.random.normal(ks[1], (3, 3, Cin, Cmid), jnp.float32) * 0.1   # HWIO
    gamma = 1.0 + 0.1 * jax.random.normal(ks[2], (Cmid,), jnp.float32)
    beta = 0.1 * jax.random.normal(ks[3], (Cmid,), jnp.float32)
    running_mean = 0.1 * jax.random.normal(ks[4], (Cmid,), jnp.float32)
    running_var = jax.random.uniform(ks[5], (Cmid,), jnp.float32, 0.5, 1.5)
    w1 = jax.random.normal(ks[6], (Cmid, n_classes), jnp.float32) * 0.1
    b1 = jax.random.normal(ks[7], (n_classes,), jnp.float32) * 0.1

    out = seg_output_head(x, w3, gamma, beta, running_mean, running_var, w1, b1, scale)
    out = jax.block_until_ready(out)

    ref = reference_forward(x, w3, gamma, beta, running_mean, running_var, w1, b1, scale)
    assert out.shape == (N, n_classes, H * scale, W * scale), out.shape
    # Tolerance vs. the f32/HIGHEST reference: kernel matmuls run at default
    # (single-pass bf16) MXU precision.
    assert jnp.allclose(out, ref, atol=3e-2, rtol=3e-2), \
        float(jnp.max(jnp.abs(out - ref)))

    print("KERNEL_OK")
</pallas_src>

<mosaic_0001>
module attributes {stable_mosaic.version = 11 : i64} {
  func.func @_seg_head_kernel(%arg0: i32, %arg1: memref<1x128x256xf32, #tpu.memory_space<vmem>>, %arg2: memref<128x128xf32, #tpu.memory_space<vmem>>, %arg3: memref<128x1xf32, #tpu.memory_space<vmem>>, %arg4: memref<8x128xf32, #tpu.memory_space<vmem>>, %arg5: memref<8x1xf32, #tpu.memory_space<vmem>>, %arg6: memref<256x1024xf32, #tpu.memory_space<vmem>>, %arg7: memref<1x8x1024xf32, #tpu.memory_space<vmem>>, %arg8: memref<128x256xf32, #tpu.memory_space<vmem>>) attributes {dimension_semantics = [#tpu.dimension_semantics<parallel>], iteration_bounds = array<i64: 2>, scalar_prefetch = 0 : i64, scratch_operands = 1 : i64, tpu.core_type = #tpu.core_type<tc>, window_params = [{transform_indices = @transform_0, window_bounds = array<i64: 1, 128, 256>}, {pipeline_mode = #tpu.pipeline_mode<synchronous>, transform_indices = @transform_1, window_bounds = array<i64: 128, 128>}, {pipeline_mode = #tpu.pipeline_mode<synchronous>, transform_indices = @transform_2, window_bounds = array<i64: 128, 1>}, {pipeline_mode = #tpu.pipeline_mode<synchronous>, transform_indices = @transform_3, window_bounds = array<i64: 8, 128>}, {pipeline_mode = #tpu.pipeline_mode<synchronous>, transform_indices = @transform_4, window_bounds = array<i64: 8, 1>}, {pipeline_mode = #tpu.pipeline_mode<synchronous>, transform_indices = @transform_5, window_bounds = array<i64: 256, 1024>}, {transform_indices = @transform_6, window_bounds = array<i64: 1, 8, 1024>}]} {
    %c0 = arith.constant 0 : index
    %c0_0 = arith.constant 0 : index
    %0 = vector.load %arg2[%c0, %c0_0] : memref<128x128xf32, #tpu.memory_space<vmem>>, vector<128x128xf32>
    %c0_1 = arith.constant 0 : index
    %c0_2 = arith.constant 0 : index
    %c0_3 = arith.constant 0 : index
    %1 = vector.load %arg1[%c0_1, %c0_2, %c0_3] : memref<1x128x256xf32, #tpu.memory_space<vmem>>, vector<1x128x256xf32>
    %2 = vector.shape_cast %1 : vector<1x128x256xf32> to vector<128x256xf32>
    %cst = arith.constant dense<0.000000e+00> : vector<128x256xf32>
    %3 = tpu.matmul %0, %2, %cst {dimension_numbers = #tpu.dot_dimension_numbers<[1], [0], [0], [1], [0, 0, 1, 1], [], []>} : vector<128x128xf32>, vector<128x256xf32>, vector<128x256xf32> -> vector<128x256xf32>
    %c0_4 = arith.constant 0 : index
    %c0_5 = arith.constant 0 : index
    %4 = vector.load %arg3[%c0_4, %c0_5] : memref<128x1xf32, #tpu.memory_space<vmem>>, vector<128x1xf32>
    %5 = vector.broadcast %4 : vector<128x1xf32> to vector<128x256xf32>
    %6 = arith.addf %3, %5 : vector<128x256xf32>
    %cst_6 = arith.constant 0.000000e+00 : f32
    %7 = vector.broadcast %cst_6 : f32 to vector<128x256xf32>
    %8 = arith.maximumf %6, %7 : vector<128x256xf32>
    %c0_7 = arith.constant 0 : index
    %c0_8 = arith.constant 0 : index
    %9 = vector.load %arg8[%c0_7, %c0_8] : memref<128x256xf32, #tpu.memory_space<vmem>>, vector<128x256xf32>
    tpu.vector_store %arg8[%c0_7, %c0_8], %8 {strides = array<i32>} : memref<128x256xf32, #tpu.memory_space<vmem>>, vector<128x256xf32>,
    %c0_9 = arith.constant 0 : index
    %c0_10 = arith.constant 0 : index
    %10 = vector.load %arg4[%c0_9, %c0_10] : memref<8x128xf32, #tpu.memory_space<vmem>>, vector<8x128xf32>
    %c0_11 = arith.constant 0 : index
    %c0_12 = arith.constant 0 : index
    %11 = vector.load %arg8[%c0_11, %c0_12] : memref<128x256xf32, #tpu.memory_space<vmem>>, vector<128x256xf32>
    %cst_13 = arith.constant dense<0.000000e+00> : vector<8x256xf32>
    %12 = tpu.matmul %10, %11, %cst_13 {dimension_numbers = #tpu.dot_dimension_numbers<[1], [0], [0], [1], [0, 0, 1, 1], [], []>} : vector<8x128xf32>, vector<128x256xf32>, vector<8x256xf32> -> vector<8x256xf32>
    %c0_14 = arith.constant 0 : index
    %c0_15 = arith.constant 0 : index
    %13 = vector.load %arg5[%c0_14, %c0_15] : memref<8x1xf32, #tpu.memory_space<vmem>>, vector<8x1xf32>
    %14 = vector.broadcast %13 : vector<8x1xf32> to vector<8x256xf32>
    %15 = arith.addf %12, %14 : vector<8x256xf32>
    %c0_16 = arith.constant 0 : index
    %c0_17 = arith.constant 0 : index
    %16 = vector.load %arg6[%c0_16, %c0_17] : memref<256x1024xf32, #tpu.memory_space<vmem>>, vector<256x1024xf32>
    %cst_18 = arith.constant dense<0.000000e+00> : vector<8x1024xf32>
    %17 = tpu.matmul %15, %16, %cst_18 {dimension_numbers = #tpu.dot_dimension_numbers<[1], [0], [0], [1], [0, 0, 1, 1], [], []>} : vector<8x256xf32>, vector<256x1024xf32>, vector<8x1024xf32> -> vector<8x1024xf32>
    %c0_19 = arith.constant 0 : index
    %c0_20 = arith.constant 0 : index
    %c0_21 = arith.constant 0 : index
    %18 = vector.load %arg7[%c0_19, %c0_20, %c0_21] : memref<1x8x1024xf32, #tpu.memory_space<vmem>>, vector<1x8x1024xf32>
    %19 = vector.shape_cast %18 : vector<1x8x1024xf32> to vector<8x1024xf32>
    %20 = vector.shape_cast %17 : vector<8x1024xf32> to vector<1x8x1024xf32>
    tpu.vector_store %arg7[%c0_19, %c0_20, %c0_21], %20 {strides = array<i32>} : memref<1x8x1024xf32, #tpu.memory_space<vmem>>, vector<1x8x1024xf32>,
    return
  }
  func.func @transform_0(%arg0: i32) -> (i32, i32, i32) {
    %c0_i32 = arith.constant 0 : i32
    %c0_i32_0 = arith.constant 0 : i32
    %c0_i32_1 = arith.constant 0 : i32
    return %arg0, %c0_i32, %c0_i32_0 : i32, i32, i32
  }
  func.func @transform_1(%arg0: i32) -> (i32, i32) {
    %c0_i32 = arith.constant 0 : i32
    %c0_i32_0 = arith.constant 0 : i32
    %c0_i32_1 = arith.constant 0 : i32
    return %c0_i32, %c0_i32_0 : i32, i32
  }
  func.func @transform_2(%arg0: i32) -> (i32, i32) {
    %c0_i32 = arith.constant 0 : i32
    %c0_i32_0 = arith.constant 0 : i32
    %c0_i32_1 = arith.constant 0 : i32
    return %c0_i32, %c0_i32_0 : i32, i32
  }
  func.func @transform_3(%arg0: i32) -> (i32, i32) {
    %c0_i32 = arith.constant 0 : i32
    %c0_i32_0 = arith.constant 0 : i32
    %c0_i32_1 = arith.constant 0 : i32
    return %c0_i32, %c0_i32_0 : i32, i32
  }
  func.func @transform_4(%arg0: i32) -> (i32, i32) {
    %c0_i32 = arith.constant 0 : i32
    %c0_i32_0 = arith.constant 0 : i32
    %c0_i32_1 = arith.constant 0 : i32
    return %c0_i32, %c0_i32_0 : i32, i32
  }
  func.func @transform_5(%arg0: i32) -> (i32, i32) {
    %c0_i32 = arith.constant 0 : i32
    %c0_i32_0 = arith.constant 0 : i32
    %c0_i32_1 = arith.constant 0 : i32
    return %c0_i32, %c0_i32_0 : i32, i32
  }
  func.func @transform_6(%arg0: i32) -> (i32, i32, i32) {
    %c0_i32 = arith.constant 0 : i32
    %c0_i32_0 = arith.constant 0 : i32
    %c0_i32_1 = arith.constant 0 : i32
    return %arg0, %c0_i32, %c0_i32_0 : i32, i32, i32
  }
}

</mosaic_0001>

<llo_original>
// kernel: tpu_custom_call.1
$region0: #{tpu_custom_call.1}
  #allocation0 [shape = 'u32[]', space=smem, size = 0x4, offset = 0x4, fixed_abs, tag = 'smem constant byte address 0x4 - core index']
  #allocation1 [shape = 'u32[144,128]{1,0:T(1,128)}', space=vmem, size = 0x12000, scoped, tag = 'internal scratch']
  #allocation2 [shape = 'f32[128,256]{1,0:T(8,128)}', space=vmem, size = 0x20000, scoped, tag = 'scratch operand']
  %s0 = inlined_call_operand.hbm [shape: f32[2,128,256], index: 0, kind: input, shape index: {}]
  %s1 = inlined_call_operand.vmem [shape: f32[128,128], index: 1, kind: input, shape index: {}]
  %s2 = inlined_call_operand.vmem [shape: f32[128,1], index: 2, kind: input, shape index: {}]
  %s3 = inlined_call_operand.vmem [shape: f32[8,128], index: 3, kind: input, shape index: {}]
  %s4 = inlined_call_operand.vmem [shape: f32[8,1], index: 4, kind: input, shape index: {}]
  %s5 = inlined_call_operand.hbm [shape: f32[256,1024], index: 5, kind: input, shape index: {}]
  %s6 = inlined_call_operand.hbm [shape: f32[2,8,1024], index: 6, kind: output, shape index: {}]
  %s7 = sld [smem:[#allocation0]]
  $region65: #{tpu_custom_call.1} parent=0
    _
  %s9 = ssub.s32 1, %s7
  %s10 = scalar_select 0, %s9, %s7
  $region1: #{tpu_custom_call.1} parent=0
    #allocation3 [shape = 'u8[262144]{0}', space=vmem, size = 0x40000, scoped, tag = 'input window, operand 0']
    #allocation4 [shape = 's32[2]{0}', space=sflag, size = 0x8, scoped, tag = 'scoped memory for tpu_custom_call.1']
    #allocation5 [shape = 's32[2]{0}', space=sflag, size = 0x8, scoped, tag = 'scoped memory for tpu_custom_call.1']
    #allocation6 [shape = 'u8[1048576]{0}', space=vmem, size = 0x100000, scoped, tag = 'input window, operand 5, single buffered']
    #allocation7 [shape = 's32[1]{0}', space=sflag, size = 0x4, scoped, tag = 'scoped memory for tpu_custom_call.1']
    #allocation8 [shape = 'u8[65536]{0}', space=vmem, size = 0x10000, scoped, tag = 'output window, operand 0']
    %11 = vsyncpa [#allocation4], 0
    %s12 = scalar_lea.sflag [#allocation4], 1
    %13 = vsyncpa %s12, 0
    %14 = vsyncpa [#allocation7], 0
    %15 = vsyncpa [#allocation5], 0
    %s16 = scalar_lea.sflag [#allocation5], 1
    %17 = vsyncpa %s16, 0
    loop: start=0, step=1, limit=4
    $region2: #{tpu_custom_call.1} parent=1 // loop_pre_header
      _
    $region3: #{tpu_custom_call.1} parent=1 // loop_header
      %s19 = sphi 0, %s23
      %p20 = scmp.ge.s32.totalorder %s19, 4
      %s29 = sphi 0, %s31
      %s32 = sphi 0, %s29
      %s33 = sphi 0, %s32
      %s49 = sphi 0, %s33
      %s53 = sphi 0, %s53
      %s55 = sphi 0, %s53
      %s56 = sphi 0, %s55
      %s70 = sphi 0, %s56
      %s74 = sphi 0, %s74
      %s76 = sphi 0, %s74
      %s77 = sphi 0, %s76
      %s91 = sphi 0, %s77
      %s95 = sphi 0, %s95
      %s97 = sphi 0, %s95
      %s98 = sphi 0, %s97
      %s112 = sphi 0, %s98
      %s116 = sphi 0, %s116
      %s118 = sphi 0, %s116
      %s119 = sphi 0, %s118
      %s133 = sphi 0, %s119
      %s137 = sphi 0, %s137
      %s139 = sphi 0, %s137
      %s140 = sphi 0, %s139
      %s154 = sphi 0, %s140
      %s160 = sphi 0, %s162
      %s163 = sphi 0, %s160
      %s164 = sphi 0, %s163
      %s180 = sphi 0, %s164
    $region4: #{tpu_custom_call.1} parent=1 // loop_header_branch
      %22 = sbr.rel (%p20) target = $region8
    $region5: #{tpu_custom_call.1} parent=1 // loop_body
      %s24 = ssub.s32 %s19, 1
      %s25 = ssub.s32 %s19, 2
      %s26 = sadd.s32 %s19, 1
      %s27 = ssub.s32 %s19, %s26
      %p28 = scmp.eq.s32.totalorder %s27, 0
      %s30 = sadd.s32 %s29, 1
      %s31 = scalar_select %p28, %s29, %s30
      %p34 = pneg %p28
      %p35 = scmp.eq.s32.totalorder %s19, 1
      %p36 = por %p34, %p35
      %p37 = scmp.ne.s32.totalorder %s29, %s32
      %p38 = scmp.eq.s32.totalorder %s19, 0
      %p39 = por %p37, %p38
      %p40 = scmp.ne.s32.totalorder %s29, %s32
      %p41 = scmp.eq.s32.totalorder %s24, 1
      %p42 = por %p40, %p41
      %p43 = scmp.ne.s32.totalorder %s32, %s33
      %p44 = scmp.eq.s32.totalorder %s24, 0
      %p45 = por %p43, %p44
      %p46 = scmp.ne.s32.totalorder %s32, %s33
      %p47 = scmp.eq.s32.totalorder %s25, 1
      %p48 = por %p46, %p47
      %p50 = scmp.ne.s32.totalorder %s33, %s49
      %p51 = scmp.eq.s32.totalorder %s25, 0
      %p52 = por %p50, %p51
      %s54 = sadd.s32 %s53, 1
      %p57 = scmp.eq.s32.totalorder %s19, 1
      %p58 = scmp.ne.s32.totalorder %s53, %s55
      %p59 = scmp.eq.s32.totalorder %s19, 0
      %p60 = por %p58, %p59
      %p61 = scmp.ne.s32.totalorder %s53, %s55
      %p62 = scmp.eq.s32.totalorder %s24, 1
      %p63 = por %p61, %p62
      %p64 = scmp.ne.s32.totalorder %s55, %s56
      %p65 = scmp.eq.s32.totalorder %s24, 0
      %p66 = por %p64, %p65
      %p67 = scmp.ne.s32.totalorder %s55, %s56
      %p68 = scmp.eq.s32.totalorder %s25, 1
      %p69 = por %p67, %p68
      %p71 = scmp.ne.s32.totalorder %s56, %s70
      %p72 = scmp.eq.s32.totalorder %s25, 0
      %p73 = por %p71, %p72
      %s75 = sadd.s32 %s74, 1
      %p78 = scmp.eq.s32.totalorder %s19, 1
      %p79 = scmp.ne.s32.totalorder %s74, %s76
      %p80 = scmp.eq.s32.totalorder %s19, 0
      %p81 = por %p79, %p80
      %p82 = scmp.ne.s32.totalorder %s74, %s76
      %p83 = scmp.eq.s32.totalorder %s24, 1
      %p84 = por %p82, %p83
      %p85 = scmp.ne.s32.totalorder %s76, %s77
      %p86 = scmp.eq.s32.totalorder %s24, 0
      %p87 = por %p85, %p86
      %p88 = scmp.ne.s32.totalorder %s76, %s77
      %p89 = scmp.eq.s32.totalorder %s25, 1
      %p90 = por %p88, %p89
      %p92 = scmp.ne.s32.totalorder %s77, %s91
      %p93 = scmp.eq.s32.totalorder %s25, 0
      %p94 = por %p92, %p93
      %s96 = sadd.s32 %s95, 1
      %p99 = scmp.eq.s32.totalorder %s19, 1
      %p100 = scmp.ne.s32.totalorder %s95, %s97
      %p101 = scmp.eq.s32.totalorder %s19, 0
      %p102 = por %p100, %p101
      %p103 = scmp.ne.s32.totalorder %s95, %s97
      %p104 = scmp.eq.s32.totalorder %s24, 1
      %p105 = por %p103, %p104
      %p106 = scmp.ne.s32.totalorder %s97, %s98
      %p107 = scmp.eq.s32.totalorder %s24, 0
      %p108 = por %p106, %p107
      %p109 = scmp.ne.s32.totalorder %s97, %s98
      %p110 = scmp.eq.s32.totalorder %s25, 1
      %p111 = por %p109, %p110
      %p113 = scmp.ne.s32.totalorder %s98, %s112
      %p114 = scmp.eq.s32.totalorder %s25, 0
      %p115 = por %p113, %p114
      %s117 = sadd.s32 %s116, 1
      %p120 = scmp.eq.s32.totalorder %s19, 1
      %p121 = scmp.ne.s32.totalorder %s116, %s118
      %p122 = scmp.eq.s32.totalorder %s19, 0
      %p123 = por %p121, %p122
      %p124 = scmp.ne.s32.totalorder %s116, %s118
      %p125 = scmp.eq.s32.totalorder %s24, 1
      %p126 = por %p124, %p125
      %p127 = scmp.ne.s32.totalorder %s118, %s119
      %p128 = scmp.eq.s32.totalorder %s24, 0
      %p129 = por %p127, %p128
      %p130 = scmp.ne.s32.totalorder %s118, %s119
      %p131 = scmp.eq.s32.totalorder %s25, 1
      %p132 = por %p130, %p131
      %p134 = scmp.ne.s32.totalorder %s119, %s133
      %p135 = scmp.eq.s32.totalorder %s25, 0
      %p136 = por %p134, %p135
      %s138 = sadd.s32 %s137, 1
      %p141 = scmp.eq.s32.totalorder %s19, 1
      %p142 = scmp.ne.s32.totalorder %s137, %s139
      %p143 = scmp.eq.s32.totalorder %s19, 0
      %p144 = por %p142, %p143
      %p145 = scmp.ne.s32.totalorder %s137, %s139
      %p146 = scmp.eq.s32.totalorder %s24, 1
      %p147 = por %p145, %p146
      %p148 = scmp.ne.s32.totalorder %s139, %s140
      %p149 = scmp.eq.s32.totalorder %s24, 0
      %p150 = por %p148, %p149
      %p151 = scmp.ne.s32.totalorder %s139, %s140
      %p152 = scmp.eq.s32.totalorder %s25, 1
      %p153 = por %p151, %p152
      %p155 = scmp.ne.s32.totalorder %s140, %s154
      %p156 = scmp.eq.s32.totalorder %s25, 0
      %p157 = por %p155, %p156
      %s158 = ssub.s32 %s19, %s26
      %p159 = scmp.eq.s32.totalorder %s158, 0
      %s161 = sadd.s32 %s160, 1
      %s162 = scalar_select %p159, %s160, %s161
      %p165 = pneg %p159
      %p166 = scmp.eq.s32.totalorder %s19, 1
      %p167 = por %p165, %p166
      %p168 = scmp.ne.s32.totalorder %s160, %s163
      %p169 = scmp.eq.s32.totalorder %s19, 0
      %p170 = por %p168, %p169
      %p171 = scmp.ne.s32.totalorder %s160, %s163
      %p172 = scmp.eq.s32.totalorder %s24, 1
      %p173 = por %p171, %p172
      %p174 = scmp.ne.s32.totalorder %s163, %s164
      %p175 = scmp.eq.s32.totalorder %s24, 0
      %p176 = por %p174, %p175
      %p177 = scmp.ne.s32.totalorder %s163, %s164
      %p178 = scmp.eq.s32.totalorder %s25, 1
      %p179 = por %p177, %p178
      %p181 = scmp.ne.s32.totalorder %s164, %s180
      %p182 = scmp.eq.s32.totalorder %s25, 0
      %p183 = por %p181, %p182
      %p184 = scmp.le.s32.totalorder 1, %s19
      %p185 = scmp.lt.s32.totalorder %s19, 3
      %p186 = pnand %p184, %p185
      %p187 = pneg %p186
      // Predicated region
      $region9: #{tpu_custom_call.1} parent=5 // pred_check
        _
      $region10: #{tpu_custom_call.1} parent=5 // pred_check_branch
        %189 = sbr.rel (%p186) target = $region12
      $region11: #{tpu_custom_call.1} parent=5 // pred_region
        %s190 = ssub.s32 %s19, 1
        // Predicated region
        $region13: #{tpu_custom_call.1} parent=11 // pred_check
          %p191 = pneg %p66
        $region14: #{tpu_custom_call.1} parent=11 // pred_check_branch
          %193 = sbr.rel (%p191) target = $region16
        $region15: #{tpu_custom_call.1} parent=11 // pred_region
          _
        $region16: #{tpu_custom_call.1} parent=11 // pred_fallthru
          _
        // Predicated region
        $region17: #{tpu_custom_call.1} parent=11 // pred_check
          %p194 = pneg %p87
        $region18: #{tpu_custom_call.1} parent=11 // pred_check_branch
          %196 = sbr.rel (%p194) target = $region20
        $region19: #{tpu_custom_call.1} parent=11 // pred_region
          _
        $region20: #{tpu_custom_call.1} parent=11 // pred_fallthru
          _
        // Predicated region
        $region21: #{tpu_custom_call.1} parent=11 // pred_check
          %p197 = pneg %p108
        $region22: #{tpu_custom_call.1} parent=11 // pred_check_branch
          %199 = sbr.rel (%p197) target = $region24
        $region23: #{tpu_custom_call.1} parent=11 // pred_region
          _
        $region24: #{tpu_custom_call.1} parent=11 // pred_fallthru
          _
        // Predicated region
        $region25: #{tpu_custom_call.1} parent=11 // pred_check
          %p200 = pneg %p129
        $region26: #{tpu_custom_call.1} parent=11 // pred_check_branch
          %202 = sbr.rel (%p200) target = $region28
        $region27: #{tpu_custom_call.1} parent=11 // pred_region
          _
        $region28: #{tpu_custom_call.1} parent=11 // pred_fallthru
          _
        // Predicated region
        $region29: #{tpu_custom_call.1} parent=11 // pred_check
          %p203 = pneg %p150
        $region30: #{tpu_custom_call.1} parent=11 // pred_check_branch
          %205 = sbr.rel (%p203) target = $region32
        $region31: #{tpu_custom_call.1} parent=11 // pred_region
          %s207 = ssub.s32 32768, 32768
          %208 = vsyncadd [#allocation7], %s207
          %s209 = sshll.u32 [#allocation6], 4
          %s210 = int_to_ptr.vmem [resolvable:$true] %s209
          %215 = dma.hbm_to_vmem [thread:$0]  %s5, 32768, %s210, [#allocation7], 1024, 1024, 64
        $region32: #{tpu_custom_call.1} parent=11 // pred_fallthru
          _
      $region12: #{tpu_custom_call.1} parent=5 // pred_fallthru
        _
      %p216 = scmp.lt.s32.totalorder %s19, 2
      // Predicated region
      $region33: #{tpu_custom_call.1} parent=5 // pred_check
        %p217 = pneg %p216
      $region34: #{tpu_custom_call.1} parent=5 // pred_check_branch
        %219 = sbr.rel (%p217) target = $region36
      $region35: #{tpu_custom_call.1} parent=5 // pred_region
        // Predicated region
        $region37: #{tpu_custom_call.1} parent=35 // pred_check
          %p220 = pneg %p39
        $region38: #{tpu_custom_call.1} parent=35 // pred_check_branch
          %222 = sbr.rel (%p220) target = $region40
        $region39: #{tpu_custom_call.1} parent=35 // pred_region
          %s223 = sand.u32 %s29, 1
          %s224 = scalar_lea.sflag [#allocation4], %s223
          %s225 = sand.u32 %s29, 1
          %s226 = smul.addr %s225, 256
          %s227 = scalar_lea.vmem [#allocation3], %s226
          %s229 = ssub.s32 4096, 4096
          %230 = vsyncadd %s224, %s229
          %s231 = smul.addr %s19, 32
          %s232 = smul.addr %s231, 128
          %s233 = scalar_lea.hbm %s0, %s232
          %s234 = sshll.u32 %s227, 4
          %s235 = int_to_ptr.vmem [resolvable:$true] %s234
          %240 = dma.hbm_to_vmem [thread:$0]  %s233, 4096, %s235, %s224, 256, 256, 16
        $region40: #{tpu_custom_call.1} parent=35 // pred_fallthru
          _
      $region36: #{tpu_custom_call.1} parent=5 // pred_fallthru
        _
      %p241 = scmp.le.s32.totalorder 1, %s19
      %p242 = scmp.lt.s32.totalorder %s19, 3
      %p243 = pnand %p241, %p242
      %p244 = pneg %p243
      // Predicated region
      $region41: #{tpu_custom_call.1} parent=5 // pred_check
        _
      $region42: #{tpu_custom_call.1} parent=5 // pred_check_branch
        %246 = sbr.rel (%p243) target = $region44
      $region43: #{tpu_custom_call.1} parent=5 // pred_region
        %s247 = ssub.s32 %s19, 1
        %s248 = sand.u32 %s32, 1
        %s249 = scalar_lea.sflag [#allocation4], %s248
        %s250 = sand.u32 %s32, 1
        %s251 = smul.addr %s250, 256
        %s252 = scalar_lea.vmem [#allocation3], %s251
        // Predicated region
        $region45: #{tpu_custom_call.1} parent=43 // pred_check
          %p253 = pneg %p45
        $region46: #{tpu_custom_call.1} parent=43 // pred_check_branch
          %255 = sbr.rel (%p253) target = $region48
        $region47: #{tpu_custom_call.1} parent=43 // pred_region
          %256 = dma.done %s249, 4096
        $region48: #{tpu_custom_call.1} parent=43 // pred_fallthru
          _
        // Predicated region
        $region49: #{tpu_custom_call.1} parent=43 // pred_check
          %p257 = pneg %p150
        $region50: #{tpu_custom_call.1} parent=43 // pred_check_branch
          %259 = sbr.rel (%p257) target = $region52
        $region51: #{tpu_custom_call.1} parent=43 // pred_region
          %260 = dma.done [#allocation7], 32768
        $region52: #{tpu_custom_call.1} parent=43 // pred_fallthru
          _
        %s261 = sand.u32 %s32, 1
        %s262 = scalar_lea.sflag [#allocation4], %s261
        %s263 = sand.u32 %s32, 1
        %s264 = smul.addr %s263, 256
        %s265 = scalar_lea.vmem [#allocation3], %s264
        %p266 = pneg %p45
        %p267 = pneg %p42
        %p268 = pneg %p66
        %p269 = pneg %p63
        %p270 = pneg %p87
        %p271 = pneg %p84
        %p272 = pneg %p108
        %p273 = pneg %p105
        %p274 = pneg %p129
        %p275 = pneg %p126
        %p276 = pneg %p150
        %p277 = pneg %p147
        %p278 = pneg %p176
        %p279 = pneg %p173
        %s280 = sand.u32 %s163, 1
        %s281 = scalar_lea.sflag [#allocation5], %s280
        %s282 = sand.u32 %s163, 1
        %s283 = smul.addr %s282, 64
        %s284 = scalar_lea.vmem [#allocation8], %s283
        %v285 = vld [vmem:[%s1] sm:$0xff]
        %v286 = vld [vmem:[%s1 + $0x8] sm:$0xff]
        %v287 = vld [vmem:[%s1 + $0x10] sm:$0xff]
        %v288 = vld [vmem:[%s1 + $0x18] sm:$0xff]
        %v289 = vld [vmem:[%s1 + $0x20] sm:$0xff]
        %v290 = vld [vmem:[%s1 + $0x28] sm:$0xff]
        %v291 = vld [vmem:[%s1 + $0x30] sm:$0xff]
        %v292 = vld [vmem:[%s1 + $0x38] sm:$0xff]
        %v293 = vld [vmem:[%s1 + $0x40] sm:$0xff]
        %v294 = vld [vmem:[%s1 + $0x48] sm:$0xff]
        %v295 = vld [vmem:[%s1 + $0x50] sm:$0xff]
        %v296 = vld [vmem:[%s1 + $0x58] sm:$0xff]
        %v297 = vld [vmem:[%s1 + $0x60] sm:$0xff]
        %v298 = vld [vmem:[%s1 + $0x68] sm:$0xff]
        %v299 = vld [vmem:[%s1 + $0x70] sm:$0xff]
        %v300 = vld [vmem:[%s1 + $0x78] sm:$0xff]
        %v301 = vld [vmem:[%s252] sm:$0xff]
        %v302 = vld [vmem:[%s252 + $0x8] sm:$0xff]
        %v303 = vld [vmem:[%s252 + $0x10] sm:$0xff]
        %v304 = vld [vmem:[%s252 + $0x18] sm:$0xff]
        %v305 = vld [vmem:[%s252 + $0x20] sm:$0xff]
        %v306 = vld [vmem:[%s252 + $0x28] sm:$0xff]
        %v307 = vld [vmem:[%s252 + $0x30] sm:$0xff]
        %v308 = vld [vmem:[%s252 + $0x38] sm:$0xff]
        %v309 = vld [vmem:[%s252 + $0x40] sm:$0xff]
        %v310 = vld [vmem:[%s252 + $0x48] sm:$0xff]
        %v311 = vld [vmem:[%s252 + $0x50] sm:$0xff]
        %v312 = vld [vmem:[%s252 + $0x58] sm:$0xff]
        %v313 = vld [vmem:[%s252 + $0x60] sm:$0xff]
        %v314 = vld [vmem:[%s252 + $0x68] sm:$0xff]
        %v315 = vld [vmem:[%s252 + $0x70] sm:$0xff]
        %v316 = vld [vmem:[%s252 + $0x78] sm:$0xff]
        %v317 = vld [vmem:[%s252 + $0x80] sm:$0xff]
        %v318 = vld [vmem:[%s252 + $0x88] sm:$0xff]
        %v319 = vld [vmem:[%s252 + $0x90] sm:$0xff]
        %v320 = vld [vmem:[%s252 + $0x98] sm:$0xff]
        %v321 = vld [vmem:[%s252 + $0xa0] sm:$0xff]
        %v322 = vld [vmem:[%s252 + $0xa8] sm:$0xff]
        %v323 = vld [vmem:[%s252 + $0xb0] sm:$0xff]
        %v324 = vld [vmem:[%s252 + $0xb8] sm:$0xff]
        %v325 = vld [vmem:[%s252 + $0xc0] sm:$0xff]
        %v326 = vld [vmem:[%s252 + $0xc8] sm:$0xff]
        %v327 = vld [vmem:[%s252 + $0xd0] sm:$0xff]
        %v328 = vld [vmem:[%s252 + $0xd8] sm:$0xff]
        %v329 = vld [vmem:[%s252 + $0xe0] sm:$0xff]
        %v330 = vld [vmem:[%s252 + $0xe8] sm:$0xff]
        %v331 = vld [vmem:[%s252 + $0xf0] sm:$0xff]
        %v332 = vld [vmem:[%s252 + $0xf8] sm:$0xff]
        %v333 = vld [vmem:[%s2] sm:$0xff]
        %v334 = vld [vmem:[%s2 + $0x8] sm:$0xff]
        %v335 = vld [vmem:[%s2 + $0x10] sm:$0xff]
        %v336 = vld [vmem:[%s2 + $0x18] sm:$0xff]
        %v337 = vld [vmem:[%s2 + $0x20] sm:$0xff]
        %v338 = vld [vmem:[%s2 + $0x28] sm:$0xff]
        %v339 = vld [vmem:[%s2 + $0x30] sm:$0xff]
        %v340 = vld [vmem:[%s2 + $0x38] sm:$0xff]
        %v341 = vld [vmem:[%s2 + $0x40] sm:$0xff]
        %v342 = vld [vmem:[%s2 + $0x48] sm:$0xff]
        %v343 = vld [vmem:[%s2 + $0x50] sm:$0xff]
        %v344 = vld [vmem:[%s2 + $0x58] sm:$0xff]
        %v345 = vld [vmem:[%s2 + $0x60] sm:$0xff]
        %v346 = vld [vmem:[%s2 + $0x68] sm:$0xff]
        %v347 = vld [vmem:[%s2 + $0x70] sm:$0xff]
        %v348 = vld [vmem:[%s2 + $0x78] sm:$0xff]
        %350 = vset.pattern.permute.xlu0 0
        %351 = vperm.xlu0 %350, %v333
        %v352 = vpop.permute.xlu0 %351
        %355 = vset.pattern.permute.xlu0 0
        %356 = vperm.xlu0 %355, %v334
        %v357 = vpop.permute.xlu0 %356
        %360 = vset.pattern.permute.xlu0 0
        %361 = vperm.xlu0 %360, %v335
        %v362 = vpop.permute.xlu0 %361
        %365 = vset.pattern.permute.xlu0 0
        %366 = vperm.xlu0 %365, %v336
        %v367 = vpop.permute.xlu0 %366
        %370 = vset.pattern.permute.xlu0 0
        %371 = vperm.xlu0 %370, %v337
        %v372 = vpop.permute.xlu0 %371
        %375 = vset.pattern.permute.xlu0 0
        %376 = vperm.xlu0 %375, %v338
        %v377 = vpop.permute.xlu0 %376
        %380 = vset.pattern.permute.xlu0 0
        %381 = vperm.xlu0 %380, %v339
        %v382 = vpop.permute.xlu0 %381
        %385 = vset.pattern.permute.xlu0 0
        %386 = vperm.xlu0 %385, %v340
        %v387 = vpop.permute.xlu0 %386
        %390 = vset.pattern.permute.xlu0 0
        %391 = vperm.xlu0 %390, %v341
        %v392 = vpop.permute.xlu0 %391
        %395 = vset.pattern.permute.xlu0 0
        %396 = vperm.xlu0 %395, %v342
        %v397 = vpop.permute.xlu0 %396
        %400 = vset.pattern.permute.xlu0 0
        %401 = vperm.xlu0 %400, %v343
        %v402 = vpop.permute.xlu0 %401
        %405 = vset.pattern.permute.xlu0 0
        %406 = vperm.xlu0 %405, %v344
        %v407 = vpop.permute.xlu0 %406
        %410 = vset.pattern.permute.xlu0 0
        %411 = vperm.xlu0 %410, %v345
        %v412 = vpop.permute.xlu0 %411
        %415 = vset.pattern.permute.xlu0 0
        %416 = vperm.xlu0 %415, %v346
        %v417 = vpop.permute.xlu0 %416
        %420 = vset.pattern.permute.xlu0 0
        %421 = vperm.xlu0 %420, %v347
        %v422 = vpop.permute.xlu0 %421
        %425 = vset.pattern.permute.xlu0 0
        %426 = vperm.xlu0 %425, %v348
        %v427 = vpop.permute.xlu0 %426
        %429 = vmatprep.subr.mxu0 %v302
        %430 = vmatpush1.msra.mxu0 %v301
        %431 = vmatprep.subr.mxu0 %v304
        %432 = vmatpush1.msra.mxu0 %v303
        %433 = vmatprep.subr.mxu0 %v306
        %434 = vmatpush1.msra.mxu0 %v305
        %435 = vmatprep.subr.mxu0 %v308
        %436 = vmatpush1.msra.mxu0 %v307
        %437 = vmatprep.subr.mxu0 %v310
        %438 = vmatpush1.msra.mxu0 %v309
        %439 = vmatprep.subr.mxu0 %v312
        %440 = vmatpush1.msra.mxu0 %v311
        %441 = vmatprep.subr.mxu0 %v314
        %442 = vmatpush1.msra.mxu0 %v313
        %443 = vmatprep.subr.mxu0 %v316
        %444 = vmatpush1.msra.mxu0 %v315
        %445 = vmatprep.subr.mxu0 %v318
        %446 = vmatpush1.msra.mxu0 %v317
        %447 = vmatprep.subr.mxu0 %v320
        %448 = vmatpush1.msra.mxu0 %v319
        %449 = vmatprep.subr.mxu0 %v322
        %450 = vmatpush1.msra.mxu0 %v321
        %451 = vmatprep.subr.mxu0 %v324
        %452 = vmatpush1.msra.mxu0 %v323
        %453 = vmatprep.subr.mxu0 %v326
        %454 = vmatpush1.msra.mxu0 %v325
        %455 = vmatprep.subr.mxu0 %v328
        %456 = vmatpush1.msra.mxu0 %v327
        %457 = vmatprep.subr.mxu0 %v330
        %458 = vmatpush1.msra.mxu0 %v329
        %459 = vmatprep.subr.mxu0 %v332
        %460 = vmatpush1.msra.mxu0 %v331
        %461 = vmatprep.subr.mxu0 0.0
        %462 = vmatpush1.msra.mxu0 0.0
        %463 = vmatprep.subr.mxu0 0.0
        %464 = vmatpush1.msra.mxu0 0.0
        %465 = vmatprep.subr.mxu0 0.0
        %466 = vmatpush1.msra.mxu0 0.0
        %467 = vmatprep.subr.mxu0 0.0
        %468 = vmatpush1.msra.mxu0 0.0
        %469 = vmatprep.subr.mxu0 0.0
        %470 = vmatpush1.msra.mxu0 0.0
        %471 = vmatprep.subr.mxu0 0.0
        %472 = vmatpush1.msra.mxu0 0.0
        %473 = vmatprep.subr.mxu0 0.0
        %474 = vmatpush1.msra.mxu0 0.0
        %475 = vmatprep.subr.mxu0 0.0
        %476 = vmatpush1.msra.mxu0 0.0
        %477 = vmatprep.subr.mxu0 0.0
        %478 = vmatpush1.msra.mxu0 0.0
        %479 = vmatprep.subr.mxu0 0.0
        %480 = vmatpush1.msra.mxu0 0.0
        %481 = vmatprep.subr.mxu0 0.0
        %482 = vmatpush1.msra.mxu0 0.0
        %483 = vmatprep.subr.mxu0 0.0
        %484 = vmatpush1.msra.mxu0 0.0
        %485 = vmatprep.subr.mxu0 0.0
        %486 = vmatpush1.msra.mxu0 0.0
        %487 = vmatprep.subr.mxu0 0.0
        %488 = vmatpush1.msra.mxu0 0.0
        %489 = vmatprep.subr.mxu0 0.0
        %490 = vmatpush1.msra.mxu0 0.0
        %491 = vmatprep.subr.mxu0 0.0
        %492 = vmatpush1.msra.mxu0 0.0
        %493 = vmatprep.mubr.f32.mxu0 0.0
        %494 = vmatmul.mubr.f32.gmra.mrb[0].mxu0 %v285
        %v495 = vpop.f32.mrb[0].mxu0
        %v496 = vadd.f32 %v352, %v495
        %v497 = vpop.f32.mrb[0].mxu0
        %v498 = vadd.f32 %v352, %v497
        %499 = vmatprep.mubr.f32.mxu0 0.0
        %500 = vmatmul.mubr.f32.gmra.mrb[0].mxu0 %v286
        %v501 = vpop.f32.mrb[0].mxu0
        %v502 = vadd.f32 %v357, %v501
        %v503 = vpop.f32.mrb[0].mxu0
        %v504 = vadd.f32 %v357, %v503
        %505 = vmatprep.mubr.f32.mxu0 0.0
        %506 = vmatmul.mubr.f32.gmra.mrb[0].mxu0 %v287
        %v507 = vpop.f32.mrb[0].mxu0
        %v508 = vadd.f32 %v362, %v507
        %v509 = vpop.f32.mrb[0].mxu0
        %v510 = vadd.f32 %v362, %v509
        %511 = vmatprep.mubr.f32.mxu0 0.0
        %512 = vmatmul.mubr.f32.gmra.mrb[0].mxu0 %v288
        %v513 = vpop.f32.mrb[0].mxu0
        %v514 = vadd.f32 %v367, %v513
        %v515 = vpop.f32.mrb[0].mxu0
        %v516 = vadd.f32 %v367, %v515
        %517 = vmatprep.mubr.f32.mxu0 0.0
        %518 = vmatmul.mubr.f32.gmra.mrb[0].mxu0 %v289
        %v519 = vpop.f32.mrb[0].mxu0
        %v520 = vadd.f32 %v372, %v519
        %v521 = vpop.f32.mrb[0].mxu0
        %v522 = vadd.f32 %v372, %v521
        %523 = vmatprep.mubr.f32.mxu0 0.0
        %524 = vmatmul.mubr.f32.gmra.mrb[0].mxu0 %v290
        %v525 = vpop.f32.mrb[0].mxu0
        %v526 = vadd.f32 %v377, %v525
        %v527 = vpop.f32.mrb[0].mxu0
        %v528 = vadd.f32 %v377, %v527
        %529 = vmatprep.mubr.f32.mxu0 0.0
        %530 = vmatmul.mubr.f32.gmra.mrb[0].mxu0 %v291
        %v531 = vpop.f32.mrb[0].mxu0
        %v532 = vadd.f32 %v382, %v531
        %v533 = vpop.f32.mrb[0].mxu0
        %v534 = vadd.f32 %v382, %v533
        %535 = vmatprep.mubr.f32.mxu0 0.0
        %536 = vmatmul.mubr.f32.gmra.mrb[0].mxu0 %v292
        %v537 = vpop.f32.mrb[0].mxu0
        %v538 = vadd.f32 %v387, %v537
        %v539 = vpop.f32.mrb[0].mxu0
        %v540 = vadd.f32 %v387, %v539
        %541 = vmatprep.mubr.f32.mxu0 0.0
        %542 = vmatmul.mubr.f32.gmra.mrb[0].mxu0 %v293
        %v543 = vpop.f32.mrb[0].mxu0
        %v544 = vadd.f32 %v392, %v543
        %v545 = vpop.f32.mrb[0].mxu0
        %v546 = vadd.f32 %v392, %v545
        %547 = vmatprep.mubr.f32.mxu0 0.0
        %548 = vmatmul.mubr.f32.gmra.mrb[0].mxu0 %v294
        %v549 = vpop.f32.mrb[0].mxu0
        %v550 = vadd.f32 %v397, %v549
        %v551 = vpop.f32.mrb[0].mxu0
        %v552 = vadd.f32 %v397, %v551
        %553 = vmatprep.mubr.f32.mxu0 0.0
        %554 = vmatmul.mubr.f32.gmra.mrb[0].mxu0 %v295
        %v555 = vpop.f32.mrb[0].mxu0
        %v556 = vadd.f32 %v402, %v555
        %v557 = vpop.f32.mrb[0].mxu0
        %v558 = vadd.f32 %v402, %v557
        %559 = vmatprep.mubr.f32.mxu0 0.0
        %560 = vmatmul.mubr.f32.gmra.mrb[0].mxu0 %v296
        %v561 = vpop.f32.mrb[0].mxu0
        %v562 = vadd.f32 %v407, %v561
        %v563 = vpop.f32.mrb[0].mxu0
        %v564 = vadd.f32 %v407, %v563
        %565 = vmatprep.mubr.f32.mxu0 0.0
        %566 = vmatmul.mubr.f32.gmra.mrb[0].mxu0 %v297
        %v567 = vpop.f32.mrb[0].mxu0
        %v568 = vadd.f32 %v412, %v567
        %v569 = vpop.f32.mrb[0].mxu0
        %v570 = vadd.f32 %v412, %v569
        %571 = vmatprep.mubr.f32.mxu0 0.0
        %572 = vmatmul.mubr.f32.gmra.mrb[0].mxu0 %v298
        %v573 = vpop.f32.mrb[0].mxu0
        %v574 = vadd.f32 %v417, %v573
        %v575 = vpop.f32.mrb[0].mxu0
        %v576 = vadd.f32 %v417, %v575
        %577 = vmatprep.mubr.f32.mxu0 0.0
        %578 = vmatmul.mubr.f32.gmra.mrb[0].mxu0 %v299
        %v579 = vpop.f32.mrb[0].mxu0
        %v580 = vadd.f32 %v422, %v579
        %v581 = vpop.f32.mrb[0].mxu0
        %v582 = vadd.f32 %v422, %v581
        %583 = vmatprep.mubr.f32.mxu0 0.0
        %584 = vmatmul.mubr.f32.gmra.mrb[0].mxu0 %v300
        %v585 = vpop.f32.mrb[0].mxu0
        %v586 = vadd.f32 %v427, %v585
        %v587 = vpop.f32.mrb[0].mxu0
        %v588 = vadd.f32 %v427, %v587
        %589 = vdwg.mxu0
        %v590 = vmax.f32 %v496, 0.0
        %v591 = vmax.f32 %v498, 0.0
        %v592 = vmax.f32 %v502, 0.0
        %v593 = vmax.f32 %v504, 0.0
        %v594 = vmax.f32 %v508, 0.0
        %v595 = vmax.f32 %v510, 0.0
        %v596 = vmax.f32 %v514, 0.0
        %v597 = vmax.f32 %v516, 0.0
        %v598 = vmax.f32 %v520, 0.0
        %v599 = vmax.f32 %v522, 0.0
        %v600 = vmax.f32 %v526, 0.0
        %v601 = vmax.f32 %v528, 0.0
        %v602 = vmax.f32 %v532, 0.0
        %v603 = vmax.f32 %v534, 0.0
        %v604 = vmax.f32 %v538, 0.0
        %v605 = vmax.f32 %v540, 0.0
        %v606 = vmax.f32 %v544, 0.0
        %v607 = vmax.f32 %v546, 0.0
        %v608 = vmax.f32 %v550, 0.0
        %v609 = vmax.f32 %v552, 0.0
        %v610 = vmax.f32 %v556, 0.0
        %v611 = vmax.f32 %v558, 0.0
        %v612 = vmax.f32 %v562, 0.0
        %v613 = vmax.f32 %v564, 0.0
        %v614 = vmax.f32 %v568, 0.0
        %v615 = vmax.f32 %v570, 0.0
        %v616 = vmax.f32 %v574, 0.0
        %v617 = vmax.f32 %v576, 0.0
        %v618 = vmax.f32 %v580, 0.0
        %v619 = vmax.f32 %v582, 0.0
        %v620 = vmax.f32 %v586, 0.0
        %v621 = vmax.f32 %v588, 0.0
        %622 = vst [vmem:[#allocation2] sm:$0xff] %v590
        %623 = vst [vmem:[#allocation2 + $0x8] sm:$0xff] %v591
        %624 = vst [vmem:[#allocation2 + $0x10] sm:$0xff] %v592
        %625 = vst [vmem:[#allocation2 + $0x18] sm:$0xff] %v593
        %626 = vst [vmem:[#allocation2 + $0x20] sm:$0xff] %v594
        %627 = vst [vmem:[#allocation2 + $0x28] sm:$0xff] %v595
        %628 = vst [vmem:[#allocation2 + $0x30] sm:$0xff] %v596
        %629 = vst [vmem:[#allocation2 + $0x38] sm:$0xff] %v597
        %630 = vst [vmem:[#allocation2 + $0x40] sm:$0xff] %v598
        %631 = vst [vmem:[#allocation2 + $0x48] sm:$0xff] %v599
        %632 = vst [vmem:[#allocation2 + $0x50] sm:$0xff] %v600
        %633 = vst [vmem:[#allocation2 + $0x58] sm:$0xff] %v601
        %634 = vst [vmem:[#allocation2 + $0x60] sm:$0xff] %v602
        %635 = vst [vmem:[#allocation2 + $0x68] sm:$0xff] %v603
        %636 = vst [vmem:[#allocation2 + $0x70] sm:$0xff] %v604
        %637 = vst [vmem:[#allocation2 + $0x78] sm:$0xff] %v605
        %638 = vst [vmem:[#allocation2 + $0x80] sm:$0xff] %v606
        %639 = vst [vmem:[#allocation2 + $0x88] sm:$0xff] %v607
        %640 = vst [vmem:[#allocation2 + $0x90] sm:$0xff] %v608
        %641 = vst [vmem:[#allocation2 + $0x98] sm:$0xff] %v609
        %642 = vst [vmem:[#allocation2 + $0xa0] sm:$0xff] %v610
        %643 = vst [vmem:[#allocation2 + $0xa8] sm:$0xff] %v611
        %644 = vst [vmem:[#allocation2 + $0xb0] sm:$0xff] %v612
        %645 = vst [vmem:[#allocation2 + $0xb8] sm:$0xff] %v613
        %646 = vst [vmem:[#allocation2 + $0xc0] sm:$0xff] %v614
        %647 = vst [vmem:[#allocation2 + $0xc8] sm:$0xff] %v615
        %648 = vst [vmem:[#allocation2 + $0xd0] sm:$0xff] %v616
        %649 = vst [vmem:[#allocation2 + $0xd8] sm:$0xff] %v617
        %650 = vst [vmem:[#allocation2 + $0xe0] sm:$0xff] %v618
        %651 = vst [vmem:[#allocation2 + $0xe8] sm:$0xff] %v619
        %652 = vst [vmem:[#allocation2 + $0xf0] sm:$0xff] %v620
        %653 = vst [vmem:[#allocation2 + $0xf8] sm:$0xff] %v621
        %v654 = vld [vmem:[%s3] sm:$0xff]
        %v655 = vld [vmem:[#allocation2] sm:$0xff]
        %v656 = vld [vmem:[#allocation2 + $0x8] sm:$0xff]
        %v657 = vld [vmem:[#allocation2 + $0x10] sm:$0xff]
        %v658 = vld [vmem:[#allocation2 + $0x18] sm:$0xff]
        %v659 = vld [vmem:[#allocation2 + $0x20] sm:$0xff]
        %v660 = vld [vmem:[#allocation2 + $0x28] sm:$0xff]
        %v661 = vld [vmem:[#allocation2 + $0x30] sm:$0xff]
        %v662 = vld [vmem:[#allocation2 + $0x38] sm:$0xff]
        %v663 = vld [vmem:[#allocation2 + $0x40] sm:$0xff]
        %v664 = vld [vmem:[#allocation2 + $0x48] sm:$0xff]
        %v665 = vld [vmem:[#allocation2 + $0x50] sm:$0xff]
        %v666 = vld [vmem:[#allocation2 + $0x58] sm:$0xff]
        %v667 = vld [vmem:[#allocation2 + $0x60] sm:$0xff]
        %v668 = vld [vmem:[#allocation2 + $0x68] sm:$0xff]
        %v669 = vld [vmem:[#allocation2 + $0x70] sm:$0xff]
        %v670 = vld [vmem:[#allocation2 + $0x78] sm:$0xff]
        %v671 = vld [vmem:[#allocation2 + $0x80] sm:$0xff]
        %v672 = vld [vmem:[#allocation2 + $0x88] sm:$0xff]
        %v673 = vld [vmem:[#allocation2 + $0x90] sm:$0xff]
        %v674 = vld [vmem:[#allocation2 + $0x98] sm:$0xff]
        %v675 = vld [vmem:[#allocation2 + $0xa0] sm:$0xff]
        %v676 = vld [vmem:[#allocation2 + $0xa8] sm:$0xff]
        %v677 = vld [vmem:[#allocation2 + $0xb0] sm:$0xff]
        %v678 = vld [vmem:[#allocation2 + $0xb8] sm:$0xff]
        %v679 = vld [vmem:[#allocation2 + $0xc0] sm:$0xff]
        %v680 = vld [vmem:[#allocation2 + $0xc8] sm:$0xff]
        %v681 = vld [vmem:[#allocation2 + $0xd0] sm:$0xff]
        %v682 = vld [vmem:[#allocation2 + $0xd8] sm:$0xff]
        %v683 = vld [vmem:[#allocation2 + $0xe0] sm:$0xff]
        %v684 = vld [vmem:[#allocation2 + $0xe8] sm:$0xff]
        %v685 = vld [vmem:[#allocation2 + $0xf0] sm:$0xff]
        %v686 = vld [vmem:[#allocation2 + $0xf8] sm:$0xff]
        %v687 = vld [vmem:[%s4] sm:$0xff]
        %689 = vset.pattern.permute.xlu0 0
        %690 = vperm.xlu0 %689, %v687
        %v691 = vpop.permute.xlu0 %690
        %693 = vmatprep.subr.mxu0 %v656
        %694 = vmatpush1.msra.mxu0 %v655
        %695 = vmatprep.subr.mxu0 %v658
        %696 = vmatpush1.msra.mxu0 %v657
        %697 = vmatprep.subr.mxu0 %v660
        %698 = vmatpush1.msra.mxu0 %v659
        %699 = vmatprep.subr.mxu0 %v662
        %700 = vmatpush1.msra.mxu0 %v661
        %701 = vmatprep.subr.mxu0 %v664
        %702 = vmatpush1.msra.mxu0 %v663
        %703 = vmatprep.subr.mxu0 %v666
        %704 = vmatpush1.msra.mxu0 %v665
        %705 = vmatprep.subr.mxu0 %v668
        %706 = vmatpush1.msra.mxu0 %v667
        %707 = vmatprep.subr.mxu0 %v670
        %708 = vmatpush1.msra.mxu0 %v669
        %709 = vmatprep.subr.mxu0 %v672
        %710 = vmatpush1.msra.mxu0 %v671
        %711 = vmatprep.subr.mxu0 %v674
        %712 = vmatpush1.msra.mxu0 %v673
        %713 = vmatprep.subr.mxu0 %v676
        %714 = vmatpush1.msra.mxu0 %v675
        %715 = vmatprep.subr.mxu0 %v678
        %716 = vmatpush1.msra.mxu0 %v677
        %717 = vmatprep.subr.mxu0 %v680
        %718 = vmatpush1.msra.mxu0 %v679
        %719 = vmatprep.subr.mxu0 %v682
        %720 = vmatpush1.msra.mxu0 %v681
        %721 = vmatprep.subr.mxu0 %v684
        %722 = vmatpush1.msra.mxu0 %v683
        %723 = vmatprep.subr.mxu0 %v686
        %724 = vmatpush1.msra.mxu0 %v685
        %725 = vmatprep.subr.mxu0 0.0
        %726 = vmatpush1.msra.mxu0 0.0
        %727 = vmatprep.subr.mxu0 0.0
        %728 = vmatpush1.msra.mxu0 0.0
        %729 = vmatprep.subr.mxu0 0.0
        %730 = vmatpush1.msra.mxu0 0.0
        %731 = vmatprep.subr.mxu0 0.0
        %732 = vmatpush1.msra.mxu0 0.0
        %733 = vmatprep.subr.mxu0 0.0
        %734 = vmatpush1.msra.mxu0 0.0
        %735 = vmatprep.subr.mxu0 0.0
        %736 = vmatpush1.msra.mxu0 0.0
        %737 = vmatprep.subr.mxu0 0.0
        %738 = vmatpush1.msra.mxu0 0.0
        %739 = vmatprep.subr.mxu0 0.0
        %740 = vmatpush1.msra.mxu0 0.0
        %741 = vmatprep.subr.mxu0 0.0
        %742 = vmatpush1.msra.mxu0 0.0
        %743 = vmatprep.subr.mxu0 0.0
        %744 = vmatpush1.msra.mxu0 0.0
        %745 = vmatprep.subr.mxu0 0.0
        %746 = vmatpush1.msra.mxu0 0.0
        %747 = vmatprep.subr.mxu0 0.0
        %748 = vmatpush1.msra.mxu0 0.0
        %749 = vmatprep.subr.mxu0 0.0
        %750 = vmatpush1.msra.mxu0 0.0
        %751 = vmatprep.subr.mxu0 0.0
        %752 = vmatpush1.msra.mxu0 0.0
        %753 = vmatprep.subr.mxu0 0.0
        %754 = vmatpush1.msra.mxu0 0.0
        %755 = vmatprep.subr.mxu0 0.0
        %756 = vmatpush1.msra.mxu0 0.0
        %757 = vmatprep.mubr.f32.mxu0 0.0
        %758 = vmatmul.mubr.f32.gmra.mrb[0].mxu0 %v654
        %v759 = vpop.f32.mrb[0].mxu0
        %v760 = vadd.f32 %v691, %v759
        %v761 = vpop.f32.mrb[0].mxu0
        %v762 = vadd.f32 %v691, %v761
        %763 = vdwg.mxu0
        %v764 = vld [vmem:[#allocation6] sm:$0xff]
        %v765 = vld [vmem:[#allocation6 + $0x8] sm:$0xff]
        %v766 = vld [vmem:[#allocation6 + $0x10] sm:$0xff]
        %v767 = vld [vmem:[#allocation6 + $0x18] sm:$0xff]
        %v768 = vld [vmem:[#allocation6 + $0x20] sm:$0xff]
        %v769 = vld [vmem:[#allocation6 + $0x28] sm:$0xff]
        %v770 = vld [vmem:[#allocation6 + $0x30] sm:$0xff]
        %v771 = vld [vmem:[#allocation6 + $0x38] sm:$0xff]
        %v772 = vld [vmem:[#allocation6 + $0x40] sm:$0xff]
        %v773 = vld [vmem:[#allocation6 + $0x48] sm:$0xff]
        %v774 = vld [vmem:[#allocation6 + $0x50] sm:$0xff]
        %v775 = vld [vmem:[#allocation6 + $0x58] sm:$0xff]
        %v776 = vld [vmem:[#allocation6 + $0x60] sm:$0xff]
        %v777 = vld [vmem:[#allocation6 + $0x68] sm:$0xff]
        %v778 = vld [vmem:[#allocation6 + $0x70] sm:$0xff]
        %v779 = vld [vmem:[#allocation6 + $0x78] sm:$0xff]
        %v780 = vld [vmem:[#allocation6 + $0x80] sm:$0xff]
        %v781 = vld [vmem:[#allocation6 + $0x88] sm:$0xff]
        %v782 = vld [vmem:[#allocation6 + $0x90] sm:$0xff]
        %v783 = vld [vmem:[#allocation6 + $0x98] sm:$0xff]
        %v784 = vld [vmem:[#allocation6 + $0xa0] sm:$0xff]
        %v785 = vld [vmem:[#allocation6 + $0xa8] sm:$0xff]
        %v786 = vld [vmem:[#allocation6 + $0xb0] sm:$0xff]
        %v787 = vld [vmem:[#allocation6 + $0xb8] sm:$0xff]
        %v788 = vld [vmem:[#allocation6 + $0xc0] sm:$0xff]
        %v789 = vld [vmem:[#allocation6 + $0xc8] sm:$0xff]
        %v790 = vld [vmem:[#allocation6 + $0xd0] sm:$0xff]
        %v791 = vld [vmem:[#allocation6 + $0xd8] sm:$0xff]
        %v792 = vld [vmem:[#allocation6 + $0xe0] sm:$0xff]
        %v793 = vld [vmem:[#allocation6 + $0xe8] sm:$0xff]
        %v794 = vld [vmem:[#allocation6 + $0xf0] sm:$0xff]
        %v795 = vld [vmem:[#allocation6 + $0xf8] sm:$0xff]
        %v796 = vld [vmem:[#allocation6 + $0x100] sm:$0xff]
        %v797 = vld [vmem:[#allocation6 + $0x108] sm:$0xff]
        %v798 = vld [vmem:[#allocation6 + $0x110] sm:$0xff]
        %v799 = vld [vmem:[#allocation6 + $0x118] sm:$0xff]
        %v800 = vld [vmem:[#allocation6 + $0x120] sm:$0xff]
        %v801 = vld [vmem:[#allocation6 + $0x128] sm:$0xff]
        %v802 = vld [vmem:[#allocation6 + $0x130] sm:$0xff]
        %v803 = vld [vmem:[#allocation6 + $0x138] sm:$0xff]
        %v804 = vld [vmem:[#allocation6 + $0x140] sm:$0xff]
        %v805 = vld [vmem:[#allocation6 + $0x148] sm:$0xff]
        %v806 = vld [vmem:[#allocation6 + $0x150] sm:$0xff]
        %v807 = vld [vmem:[#allocation6 + $0x158] sm:$0xff]
        %v808 = vld [vmem:[#allocation6 + $0x160] sm:$0xff]
        %v809 = vld [vmem:[#allocation6 + $0x168] sm:$0xff]
        %v810 = vld [vmem:[#allocation6 + $0x170] sm:$0xff]
        %v811 = vld [vmem:[#allocation6 + $0x178] sm:$0xff]
        %v812 = vld [vmem:[#allocation6 + $0x180] sm:$0xff]
        %v813 = vld [vmem:[#allocation6 + $0x188] sm:$0xff]
        %v814 = vld [vmem:[#allocation6 + $0x190] sm:$0xff]
        %v815 = vld [vmem:[#allocation6 + $0x198] sm:$0xff]
        %v816 = vld [vmem:[#allocation6 + $0x1a0] sm:$0xff]
        %v817 = vld [vmem:[#allocation6 + $0x1a8] sm:$0xff]
        %v818 = vld [vmem:[#allocation6 + $0x1b0] sm:$0xff]
        %v819 = vld [vmem:[#allocation6 + $0x1b8] sm:$0xff]
        %v820 = vld [vmem:[#allocation6 + $0x1c0] sm:$0xff]
        %v821 = vld [vmem:[#allocation6 + $0x1c8] sm:$0xff]
        %v822 = vld [vmem:[#allocation6 + $0x1d0] sm:$0xff]
        %v823 = vld [vmem:[#allocation6 + $0x1d8] sm:$0xff]
        %v824 = vld [vmem:[#allocation6 + $0x1e0] sm:$0xff]
        %v825 = vld [vmem:[#allocation6 + $0x1e8] sm:$0xff]
        %v826 = vld [vmem:[#allocation6 + $0x1f0] sm:$0xff]
        %v827 = vld [vmem:[#allocation6 + $0x1f8] sm:$0xff]
        %v828 = vld [vmem:[#allocation6 + $0x200] sm:$0xff]
        %v829 = vld [vmem:[#allocation6 + $0x208] sm:$0xff]
        %v830 = vld [vmem:[#allocation6 + $0x210] sm:$0xff]
        %v831 = vld [vmem:[#allocation6 + $0x218] sm:$0xff]
        %v832 = vld [vmem:[#allocation6 + $0x220] sm:$0xff]
        %v833 = vld [vmem:[#allocation6 + $0x228] sm:$0xff]
        %v834 = vld [vmem:[#allocation6 + $0x230] sm:$0xff]
        %v835 = vld [vmem:[#allocation6 + $0x238] sm:$0xff]
        %v836 = vld [vmem:[#allocation6 + $0x240] sm:$0xff]
        %v837 = vld [vmem:[#allocation6 + $0x248] sm:$0xff]
        %v838 = vld [vmem:[#allocation6 + $0x250] sm:$0xff]
        %v839 = vld [vmem:[#allocation6 + $0x258] sm:$0xff]
        %v840 = vld [vmem:[#allocation6 + $0x260] sm:$0xff]
        %v841 = vld [vmem:[#allocation6 + $0x268] sm:$0xff]
        %v842 = vld [vmem:[#allocation6 + $0x270] sm:$0xff]
        %v843 = vld [vmem:[#allocation6 + $0x278] sm:$0xff]
        %v844 = vld [vmem:[#allocation6 + $0x280] sm:$0xff]
        %v845 = vld [vmem:[#allocation6 + $0x288] sm:$0xff]
        %v846 = vld [vmem:[#allocation6 + $0x290] sm:$0xff]
        %v847 = vld [vmem:[#allocation6 + $0x298] sm:$0xff]
        %v848 = vld [vmem:[#allocation6 + $0x2a0] sm:$0xff]
        %v849 = vld [vmem:[#allocation6 + $0x2a8] sm:$0xff]
        %v850 = vld [vmem:[#allocation6 + $0x2b0] sm:$0xff]
        %v851 = vld [vmem:[#allocation6 + $0x2b8] sm:$0xff]
        %v852 = vld [vmem:[#allocation6 + $0x2c0] sm:$0xff]
        %v853 = vld [vmem:[#allocation6 + $0x2c8] sm:$0xff]
        %v854 = vld [vmem:[#allocation6 + $0x2d0] sm:$0xff]
        %v855 = vld [vmem:[#allocation6 + $0x2d8] sm:$0xff]
        %v856 = vld [vmem:[#allocation6 + $0x2e0] sm:$0xff]
        %v857 = vld [vmem:[#allocation6 + $0x2e8] sm:$0xff]
        %v858 = vld [vmem:[#allocation6 + $0x2f0] sm:$0xff]
        %v859 = vld [vmem:[#allocation6 + $0x2f8] sm:$0xff]
        %v860 = vld [vmem:[#allocation6 + $0x300] sm:$0xff]
        %v861 = vld [vmem:[#allocation6 + $0x308] sm:$0xff]
        %v862 = vld [vmem:[#allocation6 + $0x310] sm:$0xff]
        %v863 = vld [vmem:[#allocation6 + $0x318] sm:$0xff]
        %v864 = vld [vmem:[#allocation6 + $0x320] sm:$0xff]
        %v865 = vld [vmem:[#allocation6 + $0x328] sm:$0xff]
        %v866 = vld [vmem:[#allocation6 + $0x330] sm:$0xff]
        %v867 = vld [vmem:[#allocation6 + $0x338] sm:$0xff]
        %v868 = vld [vmem:[#allocation6 + $0x340] sm:$0xff]
        %v869 = vld [vmem:[#allocation6 + $0x348] sm:$0xff]
        %v870 = vld [vmem:[#allocation6 + $0x350] sm:$0xff]
        %v871 = vld [vmem:[#allocation6 + $0x358] sm:$0xff]
        %v872 = vld [vmem:[#allocation6 + $0x360] sm:$0xff]
        %v873 = vld [vmem:[#allocation6 + $0x368] sm:$0xff]
        %v874 = vld [vmem:[#allocation6 + $0x370] sm:$0xff]
        %v875 = vld [vmem:[#allocation6 + $0x378] sm:$0xff]
        %v876 = vld [vmem:[#allocation6 + $0x380] sm:$0xff]
        %v877 = vld [vmem:[#allocation6 + $0x388] sm:$0xff]
        %v878 = vld [vmem:[#allocation6 + $0x390] sm:$0xff]
        %v879 = vld [vmem:[#allocation6 + $0x398] sm:$0xff]
        %v880 = vld [vmem:[#allocation6 + $0x3a0] sm:$0xff]
        %v881 = vld [vmem:[#allocation6 + $0x3a8] sm:$0xff]
        %v882 = vld [vmem:[#allocation6 + $0x3b0] sm:$0xff]
        %v883 = vld [vmem:[#allocation6 + $0x3b8] sm:$0xff]
        %v884 = vld [vmem:[#allocation6 + $0x3c0] sm:$0xff]
        %v885 = vld [vmem:[#allocation6 + $0x3c8] sm:$0xff]
        %v886 = vld [vmem:[#allocation6 + $0x3d0] sm:$0xff]
        %v887 = vld [vmem:[#allocation6 + $0x3d8] sm:$0xff]
        %v888 = vld [vmem:[#allocation6 + $0x3e0] sm:$0xff]
        %v889 = vld [vmem:[#allocation6 + $0x3e8] sm:$0xff]
        %v890 = vld [vmem:[#allocation6 + $0x3f0] sm:$0xff]
        %v891 = vld [vmem:[#allocation6 + $0x3f8] sm:$0xff]
        %v892 = vld [vmem:[#allocation6 + $0x400] sm:$0xff]
        %v893 = vld [vmem:[#allocation6 + $0x408] sm:$0xff]
        %v894 = vld [vmem:[#allocation6 + $0x410] sm:$0xff]
        %v895 = vld [vmem:[#allocation6 + $0x418] sm:$0xff]
        %v896 = vld [vmem:[#allocation6 + $0x420] sm:$0xff]
        %v897 = vld [vmem:[#allocation6 + $0x428] sm:$0xff]
        %v898 = vld [vmem:[#allocation6 + $0x430] sm:$0xff]
        %v899 = vld [vmem:[#allocation6 + $0x438] sm:$0xff]
        %v900 = vld [vmem:[#allocation6 + $0x440] sm:$0xff]
        %v901 = vld [vmem:[#allocation6 + $0x448] sm:$0xff]
        %v902 = vld [vmem:[#allocation6 + $0x450] sm:$0xff]
        %v903 = vld [vmem:[#allocation6 + $0x458] sm:$0xff]
        %v904 = vld [vmem:[#allocation6 + $0x460] sm:$0xff]
        %v905 = vld [vmem:[#allocation6 + $0x468] sm:$0xff]
        %v906 = vld [vmem:[#allocation6 + $0x470] sm:$0xff]
        %v907 = vld [vmem:[#allocation6 + $0x478] sm:$0xff]
        %v908 = vld [vmem:[#allocation6 + $0x480] sm:$0xff]
        %v909 = vld [vmem:[#allocation6 + $0x488] sm:$0xff]
        %v910 = vld [vmem:[#allocation6 + $0x490] sm:$0xff]
        %v911 = vld [vmem:[#allocation6 + $0x498] sm:$0xff]
        %v912 = vld [vmem:[#allocation6 + $0x4a0] sm:$0xff]
        %v913 = vld [vmem:[#allocation6 + $0x4a8] sm:$0xff]
        %v914 = vld [vmem:[#allocation6 + $0x4b0] sm:$0xff]
        %v915 = vld [vmem:[#allocation6 + $0x4b8] sm:$0xff]
        %v916 = vld [vmem:[#allocation6 + $0x4c0] sm:$0xff]
        %v917 = vld [vmem:[#allocation6 + $0x4c8] sm:$0xff]
        %v918 = vld [vmem:[#allocation6 + $0x4d0] sm:$0xff]
        %v919 = vld [vmem:[#allocation6 + $0x4d8] sm:$0xff]
        %v920 = vld [vmem:[#allocation6 + $0x4e0] sm:$0xff]
        %v921 = vld [vmem:[#allocation6 + $0x4e8] sm:$0xff]
        %v922 = vld [vmem:[#allocation6 + $0x4f0] sm:$0xff]
        %v923 = vld [vmem:[#allocation6 + $0x4f8] sm:$0xff]
        %v924 = vld [vmem:[#allocation6 + $0x500] sm:$0xff]
        %v925 = vld [vmem:[#allocation6 + $0x508] sm:$0xff]
        %v926 = vld [vmem:[#allocation6 + $0x510] sm:$0xff]
        %v927 = vld [vmem:[#allocation6 + $0x518] sm:$0xff]
        %v928 = vld [vmem:[#allocation6 + $0x520] sm:$0xff]
        %v929 = vld [vmem:[#allocation6 + $0x528] sm:$0xff]
        %v930 = vld [vmem:[#allocation6 + $0x530] sm:$0xff]
        %v931 = vld [vmem:[#allocation6 + $0x538] sm:$0xff]
        %v932 = vld [vmem:[#allocation6 + $0x540] sm:$0xff]
        %v933 = vld [vmem:[#allocation6 + $0x548] sm:$0xff]
        %v934 = vld [vmem:[#allocation6 + $0x550] sm:$0xff]
        %v935 = vld [vmem:[#allocation6 + $0x558] sm:$0xff]
        %v936 = vld [vmem:[#allocation6 + $0x560] sm:$0xff]
        %v937 = vld [vmem:[#allocation6 + $0x568] sm:$0xff]
        %v938 = vld [vmem:[#allocation6 + $0x570] sm:$0xff]
        %v939 = vld [vmem:[#allocation6 + $0x578] sm:$0xff]
        %v940 = vld [vmem:[#allocation6 + $0x580] sm:$0xff]
        %v941 = vld [vmem:[#allocation6 + $0x588] sm:$0xff]
        %v942 = vld [vmem:[#allocation6 + $0x590] sm:$0xff]
        %v943 = vld [vmem:[#allocation6 + $0x598] sm:$0xff]
        %v944 = vld [vmem:[#allocation6 + $0x5a0] sm:$0xff]
        %v945 = vld [vmem:[#allocation6 + $0x5a8] sm:$0xff]
        %v946 = vld [vmem:[#allocation6 + $0x5b0] sm:$0xff]
        %v947 = vld [vmem:[#allocation6 + $0x5b8] sm:$0xff]
        %v948 = vld [vmem:[#allocation6 + $0x5c0] sm:$0xff]
        %v949 = vld [vmem:[#allocation6 + $0x5c8] sm:$0xff]
        %v950 = vld [vmem:[#allocation6 + $0x5d0] sm:$0xff]
        %v951 = vld [vmem:[#allocation6 + $0x5d8] sm:$0xff]
        %v952 = vld [vmem:[#allocation6 + $0x5e0] sm:$0xff]
        %v953 = vld [vmem:[#allocation6 + $0x5e8] sm:$0xff]
        %v954 = vld [vmem:[#allocation6 + $0x5f0] sm:$0xff]
        %v955 = vld [vmem:[#allocation6 + $0x5f8] sm:$0xff]
        %v956 = vld [vmem:[#allocation6 + $0x600] sm:$0xff]
        %v957 = vld [vmem:[#allocation6 + $0x608] sm:$0xff]
        %v958 = vld [vmem:[#allocation6 + $0x610] sm:$0xff]
        %v959 = vld [vmem:[#allocation6 + $0x618] sm:$0xff]
        %v960 = vld [vmem:[#allocation6 + $0x620] sm:$0xff]
        %v961 = vld [vmem:[#allocation6 + $0x628] sm:$0xff]
        %v962 = vld [vmem:[#allocation6 + $0x630] sm:$0xff]
        %v963 = vld [vmem:[#allocation6 + $0x638] sm:$0xff]
        %v964 = vld [vmem:[#allocation6 + $0x640] sm:$0xff]
        %v965 = vld [vmem:[#allocation6 + $0x648] sm:$0xff]
        %v966 = vld [vmem:[#allocation6 + $0x650] sm:$0xff]
        %v967 = vld [vmem:[#allocation6 + $0x658] sm:$0xff]
        %v968 = vld [vmem:[#allocation6 + $0x660] sm:$0xff]
        %v969 = vld [vmem:[#allocation6 + $0x668] sm:$0xff]
        %v970 = vld [vmem:[#allocation6 + $0x670] sm:$0xff]
        %v971 = vld [vmem:[#allocation6 + $0x678] sm:$0xff]
        %v972 = vld [vmem:[#allocation6 + $0x680] sm:$0xff]
        %v973 = vld [vmem:[#allocation6 + $0x688] sm:$0xff]
        %v974 = vld [vmem:[#allocation6 + $0x690] sm:$0xff]
        %v975 = vld [vmem:[#allocation6 + $0x698] sm:$0xff]
        %v976 = vld [vmem:[#allocation6 + $0x6a0] sm:$0xff]
        %v977 = vld [vmem:[#allocation6 + $0x6a8] sm:$0xff]
        %v978 = vld [vmem:[#allocation6 + $0x6b0] sm:$0xff]
        %v979 = vld [vmem:[#allocation6 + $0x6b8] sm:$0xff]
        %v980 = vld [vmem:[#allocation6 + $0x6c0] sm:$0xff]
        %v981 = vld [vmem:[#allocation6 + $0x6c8] sm:$0xff]
        %v982 = vld [vmem:[#allocation6 + $0x6d0] sm:$0xff]
        %v983 = vld [vmem:[#allocation6 + $0x6d8] sm:$0xff]
        %v984 = vld [vmem:[#allocation6 + $0x6e0] sm:$0xff]
        %v985 = vld [vmem:[#allocation6 + $0x6e8] sm:$0xff]
        %v986 = vld [vmem:[#allocation6 + $0x6f0] sm:$0xff]
        %v987 = vld [vmem:[#allocation6 + $0x6f8] sm:$0xff]
        %v988 = vld [vmem:[#allocation6 + $0x700] sm:$0xff]
        %v989 = vld [vmem:[#allocation6 + $0x708] sm:$0xff]
        %v990 = vld [vmem:[#allocation6 + $0x710] sm:$0xff]
        %v991 = vld [vmem:[#allocation6 + $0x718] sm:$0xff]
        %v992 = vld [vmem:[#allocation6 + $0x720] sm:$0xff]
        %v993 = vld [vmem:[#allocation6 + $0x728] sm:$0xff]
        %v994 = vld [vmem:[#allocation6 + $0x730] sm:$0xff]
        %v995 = vld [vmem:[#allocation6 + $0x738] sm:$0xff]
        %v996 = vld [vmem:[#allocation6 + $0x740] sm:$0xff]
        %v997 = vld [vmem:[#allocation6 + $0x748] sm:$0xff]
        %v998 = vld [vmem:[#allocation6 + $0x750] sm:$0xff]
        %v999 = vld [vmem:[#allocation6 + $0x758] sm:$0xff]
        %v1000 = vld [vmem:[#allocation6 + $0x760] sm:$0xff]
        %v1001 = vld [vmem:[#allocation6 + $0x768] sm:$0xff]
        %v1002 = vld [vmem:[#allocation6 + $0x770] sm:$0xff]
        %v1003 = vld [vmem:[#allocation6 + $0x778] sm:$0xff]
        %v1004 = vld [vmem:[#allocation6 + $0x780] sm:$0xff]
        %v1005 = vld [vmem:[#allocation6 + $0x788] sm:$0xff]
        %v1006 = vld [vmem:[#allocation6 + $0x790] sm:$0xff]
        %v1007 = vld [vmem:[#allocation6 + $0x798] sm:$0xff]
        %v1008 = vld [vmem:[#allocation6 + $0x7a0] sm:$0xff]
        %v1009 = vld [vmem:[#allocation6 + $0x7a8] sm:$0xff]
        %v1010 = vld [vmem:[#allocation6 + $0x7b0] sm:$0xff]
        %v1011 = vld [vmem:[#allocation6 + $0x7b8] sm:$0xff]
        %v1012 = vld [vmem:[#allocation6 + $0x7c0] sm:$0xff]
        %v1013 = vld [vmem:[#allocation6 + $0x7c8] sm:$0xff]
        %v1014 = vld [vmem:[#allocation6 + $0x7d0] sm:$0xff]
        %v1015 = vld [vmem:[#allocation6 + $0x7d8] sm:$0xff]
        %v1016 = vld [vmem:[#allocation6 + $0x7e0] sm:$0xff]
        %v1017 = vld [vmem:[#allocation6 + $0x7e8] sm:$0xff]
        %v1018 = vld [vmem:[#allocation6 + $0x7f0] sm:$0xff]
        %v1019 = vld [vmem:[#allocation6 + $0x7f8] sm:$0xff]
        %1020 = vmatprep.subr.mxu0 %v765
        %1021 = vmatpush1.msra.mxu0 %v764
        %1022 = vmatprep.subr.mxu0 %v773
        %1023 = vmatpush1.msra.mxu0 %v772
        %1024 = vmatprep.subr.mxu0 %v781
        %1025 = vmatpush1.msra.mxu0 %v780
        %1026 = vmatprep.subr.mxu0 %v789
        %1027 = vmatpush1.msra.mxu0 %v788
        %1028 = vmatprep.subr.mxu0 %v797
        %1029 = vmatpush1.msra.mxu0 %v796
        %1030 = vmatprep.subr.mxu0 %v805
        %1031 = vmatpush1.msra.mxu0 %v804
        %1032 = vmatprep.subr.mxu0 %v813
        %1033 = vmatpush1.msra.mxu0 %v812
        %1034 = vmatprep.subr.mxu0 %v821
        %1035 = vmatpush1.msra.mxu0 %v820
        %1036 = vmatprep.subr.mxu0 %v829
        %1037 = vmatpush1.msra.mxu0 %v828
        %1038 = vmatprep.subr.mxu0 %v837
        %1039 = vmatpush1.msra.mxu0 %v836
        %1040 = vmatprep.subr.mxu0 %v845
        %1041 = vmatpush1.msra.mxu0 %v844
        %1042 = vmatprep.subr.mxu0 %v853
        %1043 = vmatpush1.msra.mxu0 %v852
        %1044 = vmatprep.subr.mxu0 %v861
        %1045 = vmatpush1.msra.mxu0 %v860
        %1046 = vmatprep.subr.mxu0 %v869
        %1047 = vmatpush1.msra.mxu0 %v868
        %1048 = vmatprep.subr.mxu0 %v877
        %1049 = vmatpush1.msra.mxu0 %v876
        %1050 = vmatprep.subr.mxu0 %v885
        %1051 = vmatpush1.msra.mxu0 %v884
        %1052 = vmatprep.subr.mxu0 %v893
        %1053 = vmatpush1.msra.mxu0 %v892
        %1054 = vmatprep.subr.mxu0 %v901
        %1055 = vmatpush1.msra.mxu0 %v900
        %1056 = vmatprep.subr.mxu0 %v909
        %1057 = vmatpush1.msra.mxu0 %v908
        %1058 = vmatprep.subr.mxu0 %v917
        %1059 = vmatpush1.msra.mxu0 %v916
        %1060 = vmatprep.subr.mxu0 %v925
        %1061 = vmatpush1.msra.mxu0 %v924
        %1062 = vmatprep.subr.mxu0 %v933
        %1063 = vmatpush1.msra.mxu0 %v932
        %1064 = vmatprep.subr.mxu0 %v941
        %1065 = vmatpush1.msra.mxu0 %v940
        %1066 = vmatprep.subr.mxu0 %v949
        %1067 = vmatpush1.msra.mxu0 %v948
        %1068 = vmatprep.subr.mxu0 %v957
        %1069 = vmatpush1.msra.mxu0 %v956
        %1070 = vmatprep.subr.mxu0 %v965
        %1071 = vmatpush1.msra.mxu0 %v964
        %1072 = vmatprep.subr.mxu0 %v973
        %1073 = vmatpush1.msra.mxu0 %v972
        %1074 = vmatprep.subr.mxu0 %v981
        %1075 = vmatpush1.msra.mxu0 %v980
        %1076 = vmatprep.subr.mxu0 %v989
        %1077 = vmatpush1.msra.mxu0 %v988
        %1078 = vmatprep.subr.mxu0 %v997
        %1079 = vmatpush1.msra.mxu0 %v996
        %1080 = vmatprep.subr.mxu0 %v1005
        %1081 = vmatpush1.msra.mxu0 %v1004
        %1082 = vmatprep.subr.mxu0 %v1013
        %1083 = vmatpush1.msra.mxu0 %v1012
        %1084 = vmatprep.mubr.f32.mxu0 %v762
        %1085 = vmatmul.mubr.f32.gmra.mrb[0].mxu0 %v760
        %v1086 = vpop.f32.mrb[0].mxu0
        %v1087 = vadd.f32 0.0, %v1086
        %v1088 = vpop.f32.mrb[0].mxu0
        %v1089 = vadd.f32 0.0, %v1088
        %1090 = vdwg.mxu0
        %1091 = vmatprep.subr.mxu0 %v767
        %1092 = vmatpush1.msra.mxu0 %v766
        %1093 = vmatprep.subr.mxu0 %v775
        %1094 = vmatpush1.msra.mxu0 %v774
        %1095 = vmatprep.subr.mxu0 %v783
        %1096 = vmatpush1.msra.mxu0 %v782
        %1097 = vmatprep.subr.mxu0 %v791
        %1098 = vmatpush1.msra.mxu0 %v790
        %1099 = vmatprep.subr.mxu0 %v799
        %1100 = vmatpush1.msra.mxu0 %v798
        %1101 = vmatprep.subr.mxu0 %v807
        %1102 = vmatpush1.msra.mxu0 %v806
        %1103 = vmatprep.subr.mxu0 %v815
        %1104 = vmatpush1.msra.mxu0 %v814
        %1105 = vmatprep.subr.mxu0 %v823
        %1106 = vmatpush1.msra.mxu0 %v822
        %1107 = vmatprep.subr.mxu0 %v831
        %1108 = vmatpush1.msra.mxu0 %v830
        %1109 = vmatprep.subr.mxu0 %v839
        %1110 = vmatpush1.msra.mxu0 %v838
        %1111 = vmatprep.subr.mxu0 %v847
        %1112 = vmatpush1.msra.mxu0 %v846
        %1113 = vmatprep.subr.mxu0 %v855
        %1114 = vmatpush1.msra.mxu0 %v854
        %1115 = vmatprep.subr.mxu0 %v863
        %1116 = vmatpush1.msra.mxu0 %v862
        %1117 = vmatprep.subr.mxu0 %v871
        %1118 = vmatpush1.msra.mxu0 %v870
        %1119 = vmatprep.subr.mxu0 %v879
        %1120 = vmatpush1.msra.mxu0 %v878
        %1121 = vmatprep.subr.mxu0 %v887
        %1122 = vmatpush1.msra.mxu0 %v886
        %1123 = vmatprep.subr.mxu0 %v895
        %1124 = vmatpush1.msra.mxu0 %v894
        %1125 = vmatprep.subr.mxu0 %v903
        %1126 = vmatpush1.msra.mxu0 %v902
        %1127 = vmatprep.subr.mxu0 %v911
        %1128 = vmatpush1.msra.mxu0 %v910
        %1129 = vmatprep.subr.mxu0 %v919
        %1130 = vmatpush1.msra.mxu0 %v918
        %1131 = vmatprep.subr.mxu0 %v927
        %1132 = vmatpush1.msra.mxu0 %v926
        %1133 = vmatprep.subr.mxu0 %v935
        %1134 = vmatpush1.msra.mxu0 %v934
        %1135 = vmatprep.subr.mxu0 %v943
        %1136 = vmatpush1.msra.mxu0 %v942
        %1137 = vmatprep.subr.mxu0 %v951
        %1138 = vmatpush1.msra.mxu0 %v950
        %1139 = vmatprep.subr.mxu0 %v959
        %1140 = vmatpush1.msra.mxu0 %v958
        %1141 = vmatprep.subr.mxu0 %v967
        %1142 = vmatpush1.msra.mxu0 %v966
        %1143 = vmatprep.subr.mxu0 %v975
        %1144 = vmatpush1.msra.mxu0 %v974
        %1145 = vmatprep.subr.mxu0 %v983
        %1146 = vmatpush1.msra.mxu0 %v982
        %1147 = vmatprep.subr.mxu0 %v991
        %1148 = vmatpush1.msra.mxu0 %v990
        %1149 = vmatprep.subr.mxu0 %v999
        %1150 = vmatpush1.msra.mxu0 %v998
        %1151 = vmatprep.subr.mxu0 %v1007
        %1152 = vmatpush1.msra.mxu0 %v1006
        %1153 = vmatprep.subr.mxu0 %v1015
        %1154 = vmatpush1.msra.mxu0 %v1014
        %1155 = vmatprep.mubr.f32.mxu0 %v762
        %1156 = vmatmul.mubr.f32.gmra.mrb[0].mxu0 %v760
        %v1157 = vpop.f32.mrb[0].mxu0
        %v1158 = vadd.f32 0.0, %v1157
        %v1159 = vpop.f32.mrb[0].mxu0
        %v1160 = vadd.f32 0.0, %v1159
        %1161 = vdwg.mxu0
        %1162 = vmatprep.subr.mxu0 %v769
        %1163 = vmatpush1.msra.mxu0 %v768
        %1164 = vmatprep.subr.mxu0 %v777
        %1165 = vmatpush1.msra.mxu0 %v776
        %1166 = vmatprep.subr.mxu0 %v785
        %1167 = vmatpush1.msra.mxu0 %v784
        %1168 = vmatprep.subr.mxu0 %v793
        %1169 = vmatpush1.msra.mxu0 %v792
        %1170 = vmatprep.subr.mxu0 %v801
        %1171 = vmatpush1.msra.mxu0 %v800
        %1172 = vmatprep.subr.mxu0 %v809
        %1173 = vmatpush1.msra.mxu0 %v808
        %1174 = vmatprep.subr.mxu0 %v817
        %1175 = vmatpush1.msra.mxu0 %v816
        %1176 = vmatprep.subr.mxu0 %v825
        %1177 = vmatpush1.msra.mxu0 %v824
        %1178 = vmatprep.subr.mxu0 %v833
        %1179 = vmatpush1.msra.mxu0 %v832
        %1180 = vmatprep.subr.mxu0 %v841
        %1181 = vmatpush1.msra.mxu0 %v840
        %1182 = vmatprep.subr.mxu0 %v849
        %1183 = vmatpush1.msra.mxu0 %v848
        %1184 = vmatprep.subr.mxu0 %v857
        %1185 = vmatpush1.msra.mxu0 %v856
        %1186 = vmatprep.subr.mxu0 %v865
        %1187 = vmatpush1.msra.mxu0 %v864
        %1188 = vmatprep.subr.mxu0 %v873
        %1189 = vmatpush1.msra.mxu0 %v872
        %1190 = vmatprep.subr.mxu0 %v881
        %1191 = vmatpush1.msra.mxu0 %v880
        %1192 = vmatprep.subr.mxu0 %v889
        %1193 = vmatpush1.msra.mxu0 %v888
        %1194 = vmatprep.subr.mxu0 %v897
        %1195 = vmatpush1.msra.mxu0 %v896
        %1196 = vmatprep.subr.mxu0 %v905
        %1197 = vmatpush1.msra.mxu0 %v904
        %1198 = vmatprep.subr.mxu0 %v913
        %1199 = vmatpush1.msra.mxu0 %v912
        %1200 = vmatprep.subr.mxu0 %v921
        %1201 = vmatpush1.msra.mxu0 %v920
        %1202 = vmatprep.subr.mxu0 %v929
        %1203 = vmatpush1.msra.mxu0 %v928
        %1204 = vmatprep.subr.mxu0 %v937
        %1205 = vmatpush1.msra.mxu0 %v936
        %1206 = vmatprep.subr.mxu0 %v945
        %1207 = vmatpush1.msra.mxu0 %v944
        %1208 = vmatprep.subr.mxu0 %v953
        %1209 = vmatpush1.msra.mxu0 %v952
        %1210 = vmatprep.subr.mxu0 %v961
        %1211 = vmatpush1.msra.mxu0 %v960
        %1212 = vmatprep.subr.mxu0 %v969
        %1213 = vmatpush1.msra.mxu0 %v968
        %1214 = vmatprep.subr.mxu0 %v977
        %1215 = vmatpush1.msra.mxu0 %v976
        %1216 = vmatprep.subr.mxu0 %v985
        %1217 = vmatpush1.msra.mxu0 %v984
        %1218 = vmatprep.subr.mxu0 %v993
        %1219 = vmatpush1.msra.mxu0 %v992
        %1220 = vmatprep.subr.mxu0 %v1001
        %1221 = vmatpush1.msra.mxu0 %v1000
        %1222 = vmatprep.subr.mxu0 %v1009
        %1223 = vmatpush1.msra.mxu0 %v1008
        %1224 = vmatprep.subr.mxu0 %v1017
        %1225 = vmatpush1.msra.mxu0 %v1016
        %1226 = vmatprep.mubr.f32.mxu0 %v762
        %1227 = vmatmul.mubr.f32.gmra.mrb[0].mxu0 %v760
        %v1228 = vpop.f32.mrb[0].mxu0
        %v1229 = vadd.f32 0.0, %v1228
        %v1230 = vpop.f32.mrb[0].mxu0
        %v1231 = vadd.f32 0.0, %v1230
        %1232 = vdwg.mxu0
        %1233 = vmatprep.subr.mxu0 %v771
        %1234 = vmatpush1.msra.mxu0 %v770
        %1235 = vmatprep.subr.mxu0 %v779
        %1236 = vmatpush1.msra.mxu0 %v778
        %1237 = vmatprep.subr.mxu0 %v787
        %1238 = vmatpush1.msra.mxu0 %v786
        %1239 = vmatprep.subr.mxu0 %v795
        %1240 = vmatpush1.msra.mxu0 %v794
        %1241 = vmatprep.subr.mxu0 %v803
        %1242 = vmatpush1.msra.mxu0 %v802
        %1243 = vmatprep.subr.mxu0 %v811
        %1244 = vmatpush1.msra.mxu0 %v810
        %1245 = vmatprep.subr.mxu0 %v819
        %1246 = vmatpush1.msra.mxu0 %v818
        %1247 = vmatprep.subr.mxu0 %v827
        %1248 = vmatpush1.msra.mxu0 %v826
        %1249 = vmatprep.subr.mxu0 %v835
        %1250 = vmatpush1.msra.mxu0 %v834
        %1251 = vmatprep.subr.mxu0 %v843
        %1252 = vmatpush1.msra.mxu0 %v842
        %1253 = vmatprep.subr.mxu0 %v851
        %1254 = vmatpush1.msra.mxu0 %v850
        %1255 = vmatprep.subr.mxu0 %v859
        %1256 = vmatpush1.msra.mxu0 %v858
        %1257 = vmatprep.subr.mxu0 %v867
        %1258 = vmatpush1.msra.mxu0 %v866
        %1259 = vmatprep.subr.mxu0 %v875
        %1260 = vmatpush1.msra.mxu0 %v874
        %1261 = vmatprep.subr.mxu0 %v883
        %1262 = vmatpush1.msra.mxu0 %v882
        %1263 = vmatprep.subr.mxu0 %v891
        %1264 = vmatpush1.msra.mxu0 %v890
        %1265 = vmatprep.subr.mxu0 %v899
        %1266 = vmatpush1.msra.mxu0 %v898
        %1267 = vmatprep.subr.mxu0 %v907
        %1268 = vmatpush1.msra.mxu0 %v906
        %1269 = vmatprep.subr.mxu0 %v915
        %1270 = vmatpush1.msra.mxu0 %v914
        %1271 = vmatprep.subr.mxu0 %v923
        %1272 = vmatpush1.msra.mxu0 %v922
        %1273 = vmatprep.subr.mxu0 %v931
        %1274 = vmatpush1.msra.mxu0 %v930
        %1275 = vmatprep.subr.mxu0 %v939
        %1276 = vmatpush1.msra.mxu0 %v938
        %1277 = vmatprep.subr.mxu0 %v947
        %1278 = vmatpush1.msra.mxu0 %v946
        %1279 = vmatprep.subr.mxu0 %v955
        %1280 = vmatpush1.msra.mxu0 %v954
        %1281 = vmatprep.subr.mxu0 %v963
        %1282 = vmatpush1.msra.mxu0 %v962
        %1283 = vmatprep.subr.mxu0 %v971
        %1284 = vmatpush1.msra.mxu0 %v970
        %1285 = vmatprep.subr.mxu0 %v979
        %1286 = vmatpush1.msra.mxu0 %v978
        %1287 = vmatprep.subr.mxu0 %v987
        %1288 = vmatpush1.msra.mxu0 %v986
        %1289 = vmatprep.subr.mxu0 %v995
        %1290 = vmatpush1.msra.mxu0 %v994
        %1291 = vmatprep.subr.mxu0 %v1003
        %1292 = vmatpush1.msra.mxu0 %v1002
        %1293 = vmatprep.subr.mxu0 %v1011
        %1294 = vmatpush1.msra.mxu0 %v1010
        %1295 = vmatprep.subr.mxu0 %v1019
        %1296 = vmatpush1.msra.mxu0 %v1018
        %1297 = vmatprep.mubr.f32.mxu0 %v762
        %1298 = vmatmul.mubr.f32.gmra.mrb[0].mxu0 %v760
        %v1299 = vpop.f32.mrb[0].mxu0
        %v1300 = vadd.f32 0.0, %v1299
        %v1301 = vpop.f32.mrb[0].mxu0
        %v1302 = vadd.f32 0.0, %v1301
        %1303 = vdwg.mxu0
        %1304 = vst [vmem:[%s284] sm:$0xff] %v1087
        %1305 = vst [vmem:[%s284 + $0x8] sm:$0xff] %v1089
        %1306 = vst [vmem:[%s284 + $0x10] sm:$0xff] %v1158
        %1307 = vst [vmem:[%s284 + $0x18] sm:$0xff] %v1160
        %1308 = vst [vmem:[%s284 + $0x20] sm:$0xff] %v1229
        %1309 = vst [vmem:[%s284 + $0x28] sm:$0xff] %v1231
        %1310 = vst [vmem:[%s284 + $0x30] sm:$0xff] %v1300
        %1311 = vst [vmem:[%s284 + $0x38] sm:$0xff] %v1302
        %s1312 = sand.u32 %s163, 1
        %s1313 = scalar_lea.sflag [#allocation5], %s1312
        %s1314 = sand.u32 %s163, 1
        %s1315 = smul.addr %s1314, 64
        %s1316 = scalar_lea.vmem [#allocation8], %s1315
        // Predicated region
        $region53: #{tpu_custom_call.1} parent=43 // pred_check
          %p1317 = pneg %p173
        $region54: #{tpu_custom_call.1} parent=43 // pred_check_branch
          %1319 = sbr.rel (%p1317) target = $region56
        $region55: #{tpu_custom_call.1} parent=43 // pred_region
          %s1321 = ssub.s32 1024, 1024
          %1322 = vsyncadd %s1313, %s1321
          %s1323 = smul.addr %s24, 8
          %s1324 = smul.addr %s1323, 128
          %s1325 = scalar_lea.hbm %s6, %s1324
          %s1327 = sshll.u32 %s1316, 4
          %s1328 = int_to_ptr.vmem [resolvable:$true] %s1327
          %1330 = dma.vmem_to_hbm [thread:$0]  %s1328, 1024, %s1325, %s1313
        $region56: #{tpu_custom_call.1} parent=43 // pred_fallthru
          _
      $region44: #{tpu_custom_call.1} parent=5 // pred_fallthru
        _
      %p1331 = scmp.le.s32.totalorder 2, %s19
      // Predicated region
      $region57: #{tpu_custom_call.1} parent=5 // pred_check
        %p1332 = pneg %p1331
      $region58: #{tpu_custom_call.1} parent=5 // pred_check_branch
        %1334 = sbr.rel (%p1332) target = $region60
      $region59: #{tpu_custom_call.1} parent=5 // pred_region
        %s1335 = ssub.s32 %s19, 2
        // Predicated region
        $region61: #{tpu_custom_call.1} parent=59 // pred_check
          %p1336 = pneg %p179
        $region62: #{tpu_custom_call.1} parent=59 // pred_check_branch
          %1338 = sbr.rel (%p1336) target = $region64
        $region63: #{tpu_custom_call.1} parent=59 // pred_region
          %s1339 = sand.u32 %s164, 1
          %s1340 = scalar_lea.sflag [#allocation5], %s1339
          %s1341 = sand.u32 %s164, 1
          %s1342 = smul.addr %s1341, 64
          %s1343 = scalar_lea.vmem [#allocation8], %s1342
          %1344 = dma.done %s1340, 1024
        $region64: #{tpu_custom_call.1} parent=59 // pred_fallthru
          _
      $region60: #{tpu_custom_call.1} parent=5 // pred_fallthru
        _
    $region6: #{tpu_custom_call.1} parent=1 // loop_footer
      %s23 = sadd.s32 1, %s19
    $region7: #{tpu_custom_call.1} parent=1 // loop_footer_branch
      %18 = sbr.rel target = $region3
    $region8: #{tpu_custom_call.1} parent=1 // loop_exit
      _
    %1345 = vsyncpa [#allocation4], 1
    %s1346 = scalar_lea.sflag [#allocation4], 1
    %1347 = vsyncpa %s1346, 1
    %1348 = vsyncpa [#allocation7], 1
    %1349 = vsyncpa [#allocation5], 1
    %s1350 = scalar_lea.sflag [#allocation5], 1
    %1351 = vsyncpa %s1350, 1

</llo_original>
